<compile_context>
chip_gen: v7x
topology: tpu7x:2x2x1
jax: 0.10.0
libtpu: 0.0.40
codegen_flags: <defaults>
</compile_context>

<pallas_src>
import functools

import jax
import jax.numpy as jnp
from jax.experimental import pallas as pl
from jax.experimental.pallas import tpu as pltpu


A_PAD = 128  # lane-dense logits / probs width; real action columns are [:A]


def actor_kernel(x_ref, w1_ref, b1_ref, w2_ref, b2_ref, out_ref):
    # x:   [TB, S]        (S = raw state_dim; full-dim block, no padding)
    # w1:  [S, H]   b1: [1, H]
    # w2:  [H, A_PAD] b2: [1, A_PAD]  (padded logit columns carry -1e30 bias)
    # out: [TB, A_PAD]
    h = jnp.dot(x_ref[...], w1_ref[...], preferred_element_type=jnp.float32)
    h = jnp.maximum(h + b1_ref[...], 0.0)
    logits = (
        jnp.dot(h, w2_ref[...], preferred_element_type=jnp.float32) + b2_ref[...]
    )

    # Numerically stable softmax over the lane-dense last axis. Padded columns
    # have logits ~ -1e30 -> exp == 0 -> denominator is exact. Exact divide
    # (not the approx vrcp) so rows sum to 1 for downstream sampling.
    m = jnp.max(logits, axis=-1, keepdims=True)
    e = jnp.exp(logits - m)
    out_ref[...] = e / jnp.sum(e, axis=-1, keepdims=True)


def prepare_actor_params(w1, b1, w2, b2):
    """One-time parameter prep, hoisted off the per-forward critical path."""
    H = w1.shape[1]
    A = w2.shape[1]
    assert A <= A_PAD
    w1p = w1.astype(jnp.float32)
    b1p = b1.reshape(1, H).astype(jnp.float32)
    w2p = jnp.pad(w2.astype(jnp.float32), ((0, 0), (0, A_PAD - A)))
    b2p = jnp.concatenate(
        [b2.astype(jnp.float32), jnp.full((A_PAD - A,), -1e30, jnp.float32)]
    ).reshape(1, A_PAD)
    return w1p, b1p, w2p, b2p


def _choose_tb(B, max_tb=2048):
    # Target ~2 grid steps: on v7x that is one step per TensorCore (the batch
    # axis is "parallel"); on 1-TC chips the extra ~0.35us step is negligible.
    # Cap at 2048 rows so f32 intermediates + double-buffered blocks stay far
    # below even v5e's 16 MiB scoped-VMEM default (no vmem_limit bump needed).
    tb = max(8, -(-B // 2))          # ceil(B / 2), at least one sublane group
    tb = ((tb + 7) // 8) * 8         # sublane-align
    return min(tb, max_tb)


@functools.partial(jax.jit, static_argnames=("action_dim", "block_b"))
def actor_forward(x, w1, b1, w2p, b2p, *, action_dim, block_b=None):
    """softmax(relu(x @ w1 + b1) @ w2 + b2); expects prepared (padded) params."""
    B, S = x.shape
    H = w1.shape[1]

    TB = block_b if block_b is not None else _choose_tb(B)
    grid = (pl.cdiv(B, TB),)  # ragged final block handled by Pallas masking

    out = pl.pallas_call(
        actor_kernel,
        out_shape=jax.ShapeDtypeStruct((B, A_PAD), jnp.float32),
        grid=grid,
        in_specs=[
            pl.BlockSpec((TB, S), lambda i: (i, 0)),      # S == full array dim
            pl.BlockSpec((S, H), lambda i: (0, 0)),       # weights stay resident
            pl.BlockSpec((1, H), lambda i: (0, 0)),
            pl.BlockSpec((H, A_PAD), lambda i: (0, 0)),
            pl.BlockSpec((1, A_PAD), lambda i: (0, 0)),
        ],
        out_specs=pl.BlockSpec((TB, A_PAD), lambda i: (i, 0)),
        compiler_params=pltpu.CompilerParams(
            dimension_semantics=("parallel",),
        ),
    )(x, w1, b1, w2p, b2p)

    # TODO(synk): downstream consumers (categorical sampling / log-prob) could
    # read the padded [B, 128] buffer directly; this slice only exists to match
    # the module's [B, action_dim] return contract.
    return out[:, :action_dim]


def init_params(key, state_dim, hidden_dim, action_dim):
    # Mimics PyTorch default Linear init: U(-1/sqrt(fan_in), 1/sqrt(fan_in)).
    k1, k2, k3, k4 = jax.random.split(key, 4)
    lim1 = 1.0 / jnp.sqrt(jnp.float32(state_dim))
    lim2 = 1.0 / jnp.sqrt(jnp.float32(hidden_dim))
    w1 = jax.random.uniform(k1, (state_dim, hidden_dim), jnp.float32, -lim1, lim1)
    b1 = jax.random.uniform(k2, (hidden_dim,), jnp.float32, -lim1, lim1)
    w2 = jax.random.uniform(k3, (hidden_dim, action_dim), jnp.float32, -lim2, lim2)
    b2 = jax.random.uniform(k4, (action_dim,), jnp.float32, -lim2, lim2)
    return w1, b1, w2, b2


def _reference(x, w1, b1, w2, b2):
    h = jnp.maximum(x @ w1 + b1, 0.0)
    return jax.nn.softmax(h @ w2 + b2, axis=-1)


if __name__ == "__main__":
    STATE_DIM = 4      # CartPole-v1 observation dim
    HIDDEN_DIM = 128
    ACTION_DIM = 2     # CartPole-v1 action_space.n

    key = jax.random.PRNGKey(0)
    kx1, kx2, kp = jax.random.split(key, 3)
    w1, b1, w2, b2 = init_params(kp, STATE_DIM, HIDDEN_DIM, ACTION_DIM)

    # One-time prep (padding / reshapes hoisted off the per-call path).
    w1p, b1p, w2p, b2p = prepare_actor_params(w1, b1, w2, b2)

    # Batched path: 2 grid steps (one per TensorCore on v7x).
    x_big = jax.random.normal(kx1, (1024, STATE_DIM), jnp.float32)
    probs_big = jax.block_until_ready(
        actor_forward(x_big, w1p, b1p, w2p, b2p, action_dim=ACTION_DIM)
    )

    # Small / ragged batch: exercises the masked partial final block.
    x_small = jax.random.normal(kx2, (5, STATE_DIM), jnp.float32)
    probs_small = jax.block_until_ready(
        actor_forward(x_small, w1p, b1p, w2p, b2p, action_dim=ACTION_DIM)
    )

    for x, probs in ((x_big, probs_big), (x_small, probs_small)):
        ref = _reference(x, w1, b1, w2, b2)
        assert probs.shape == (x.shape[0], ACTION_DIM)
        # Full f32 pipeline -> tight tolerance vs f32 reference.
        assert jnp.allclose(probs, ref, atol=1e-5, rtol=1e-5), "mismatch vs reference"
        assert jnp.allclose(jnp.sum(probs, axis=-1), 1.0, atol=1e-6)

    print("KERNEL_OK")
</pallas_src>

<mosaic_0001>
module attributes {stable_mosaic.version = 11 : i64} {
  func.func @actor_kernel(%arg0: i32, %arg1: memref<512x4xf32, #tpu.memory_space<vmem>>, %arg2: memref<4x128xf32, #tpu.memory_space<vmem>>, %arg3: memref<1x128xf32, #tpu.memory_space<vmem>>, %arg4: memref<128x128xf32, #tpu.memory_space<vmem>>, %arg5: memref<1x128xf32, #tpu.memory_space<vmem>>, %arg6: memref<512x128xf32, #tpu.memory_space<vmem>>) attributes {dimension_semantics = [#tpu.dimension_semantics<parallel>], iteration_bounds = array<i64: 2>, scalar_prefetch = 0 : i64, scratch_operands = 0 : i64, tpu.core_type = #tpu.core_type<tc>, window_params = [{transform_indices = @transform_0, window_bounds = array<i64: 512, 4>}, {pipeline_mode = #tpu.pipeline_mode<synchronous>, transform_indices = @transform_1, window_bounds = array<i64: 4, 128>}, {pipeline_mode = #tpu.pipeline_mode<synchronous>, transform_indices = @transform_2, window_bounds = array<i64: 1, 128>}, {pipeline_mode = #tpu.pipeline_mode<synchronous>, transform_indices = @transform_3, window_bounds = array<i64: 128, 128>}, {pipeline_mode = #tpu.pipeline_mode<synchronous>, transform_indices = @transform_4, window_bounds = array<i64: 1, 128>}, {transform_indices = @transform_5, window_bounds = array<i64: 512, 128>}]} {
    %c0 = arith.constant 0 : index
    %c0_0 = arith.constant 0 : index
    %0 = vector.load %arg1[%c0, %c0_0] : memref<512x4xf32, #tpu.memory_space<vmem>>, vector<512x4xf32>
    %c0_1 = arith.constant 0 : index
    %c0_2 = arith.constant 0 : index
    %1 = vector.load %arg2[%c0_1, %c0_2] : memref<4x128xf32, #tpu.memory_space<vmem>>, vector<4x128xf32>
    %cst = arith.constant dense<0.000000e+00> : vector<512x128xf32>
    %2 = tpu.matmul %0, %1, %cst {dimension_numbers = #tpu.dot_dimension_numbers<[1], [0], [0], [1], [0, 0, 1, 1], [], []>} : vector<512x4xf32>, vector<4x128xf32>, vector<512x128xf32> -> vector<512x128xf32>
    %c0_3 = arith.constant 0 : index
    %c0_4 = arith.constant 0 : index
    %3 = vector.load %arg3[%c0_3, %c0_4] : memref<1x128xf32, #tpu.memory_space<vmem>>, vector<1x128xf32>
    %4 = vector.broadcast %3 : vector<1x128xf32> to vector<512x128xf32>
    %5 = arith.addf %2, %4 : vector<512x128xf32>
    %cst_5 = arith.constant 0.000000e+00 : f32
    %6 = vector.broadcast %cst_5 : f32 to vector<512x128xf32>
    %7 = arith.maximumf %5, %6 : vector<512x128xf32>
    %c0_6 = arith.constant 0 : index
    %c0_7 = arith.constant 0 : index
    %8 = vector.load %arg4[%c0_6, %c0_7] : memref<128x128xf32, #tpu.memory_space<vmem>>, vector<128x128xf32>
    %cst_8 = arith.constant dense<0.000000e+00> : vector<512x128xf32>
    %9 = tpu.matmul %7, %8, %cst_8 {dimension_numbers = #tpu.dot_dimension_numbers<[1], [0], [0], [1], [0, 0, 1, 1], [], []>} : vector<512x128xf32>, vector<128x128xf32>, vector<512x128xf32> -> vector<512x128xf32>
    %c0_9 = arith.constant 0 : index
    %c0_10 = arith.constant 0 : index
    %10 = vector.load %arg5[%c0_9, %c0_10] : memref<1x128xf32, #tpu.memory_space<vmem>>, vector<1x128xf32>
    %11 = vector.broadcast %10 : vector<1x128xf32> to vector<512x128xf32>
    %12 = arith.addf %9, %11 : vector<512x128xf32>
    %cst_11 = arith.constant dense<0xFF800000> : vector<512xf32>
    %13 = vector.multi_reduction <maximumf>, %12, %cst_11 [1] : vector<512x128xf32> to vector<512xf32>
    %14 = vector.shape_cast %13 : vector<512xf32> to vector<512x1xf32>
    %15 = vector.broadcast %14 : vector<512x1xf32> to vector<512x128xf32>
    %16 = arith.subf %12, %15 : vector<512x128xf32>
    %17 = math.exp %16 : vector<512x128xf32>
    %cst_12 = arith.constant dense<0.000000e+00> : vector<512xf32>
    %18 = vector.multi_reduction <add>, %17, %cst_12 [1] : vector<512x128xf32> to vector<512xf32>
    %19 = vector.shape_cast %18 : vector<512xf32> to vector<512x1xf32>
    %20 = vector.broadcast %19 : vector<512x1xf32> to vector<512x128xf32>
    %21 = arith.divf %17, %20 : vector<512x128xf32>
    %c0_13 = arith.constant 0 : index
    %c0_14 = arith.constant 0 : index
    %22 = vector.load %arg6[%c0_13, %c0_14] : memref<512x128xf32, #tpu.memory_space<vmem>>, vector<512x128xf32>
    tpu.vector_store %arg6[%c0_13, %c0_14], %21 {strides = array<i32>} : memref<512x128xf32, #tpu.memory_space<vmem>>, vector<512x128xf32>,
    return
  }
  func.func @transform_0(%arg0: i32) -> (i32, i32) {
    %c0_i32 = arith.constant 0 : i32
    %c0_i32_0 = arith.constant 0 : i32
    return %arg0, %c0_i32 : i32, i32
  }
  func.func @transform_1(%arg0: i32) -> (i32, i32) {
    %c0_i32 = arith.constant 0 : i32
    %c0_i32_0 = arith.constant 0 : i32
    %c0_i32_1 = arith.constant 0 : i32
    return %c0_i32, %c0_i32_0 : i32, i32
  }
  func.func @transform_2(%arg0: i32) -> (i32, i32) {
    %c0_i32 = arith.constant 0 : i32
    %c0_i32_0 = arith.constant 0 : i32
    %c0_i32_1 = arith.constant 0 : i32
    return %c0_i32, %c0_i32_0 : i32, i32
  }
  func.func @transform_3(%arg0: i32) -> (i32, i32) {
    %c0_i32 = arith.constant 0 : i32
    %c0_i32_0 = arith.constant 0 : i32
    %c0_i32_1 = arith.constant 0 : i32
    return %c0_i32, %c0_i32_0 : i32, i32
  }
  func.func @transform_4(%arg0: i32) -> (i32, i32) {
    %c0_i32 = arith.constant 0 : i32
    %c0_i32_0 = arith.constant 0 : i32
    %c0_i32_1 = arith.constant 0 : i32
    return %c0_i32, %c0_i32_0 : i32, i32
  }
  func.func @transform_5(%arg0: i32) -> (i32, i32) {
    %c0_i32 = arith.constant 0 : i32
    %c0_i32_0 = arith.constant 0 : i32
    return %arg0, %c0_i32 : i32, i32
  }
}

</mosaic_0001>

<llo_original>
// kernel: actor_forward.1
$region0: #{actor_forward.1}
  #allocation0 [shape = 'u32[]', space=smem, size = 0x4, offset = 0x4, fixed_abs, tag = 'smem constant byte address 0x4 - core index']
  #allocation1 [shape = 'u32[144,128]{1,0:T(1,128)}', space=vmem, size = 0x12000, scoped, tag = 'internal scratch']
  %s0 = inlined_call_operand.vmem [shape: f32[1024,4], index: 0, kind: input, shape index: {}]
  %s1 = inlined_call_operand.vmem [shape: f32[4,128], index: 1, kind: input, shape index: {}]
  %s2 = inlined_call_operand.vmem [shape: f32[1,128], index: 2, kind: input, shape index: {}]
  %s3 = inlined_call_operand.vmem [shape: f32[128,128], index: 3, kind: input, shape index: {}]
  %s4 = inlined_call_operand.vmem [shape: f32[1,128], index: 4, kind: input, shape index: {}]
  %s5 = inlined_call_operand.vmem [shape: f32[1024,128], index: 5, kind: output, shape index: {}]
  %s6 = sld [smem:[#allocation0]]
  $region53: #{actor_forward.1} parent=0
    _
  %s8 = ssub.s32 1, %s6
  %s9 = scalar_select 0, %s8, %s6
  loop: start=0, step=1, limit=4
  $region2: #{actor_forward.1} parent=0 // loop_pre_header
    _
  $region3: #{actor_forward.1} parent=0 // loop_header
    %s11 = sphi 0, %s15
    %p12 = scmp.ge.s32.totalorder %s11, 4
    %s21 = sphi 0, %s23
    %s24 = sphi 0, %s21
    %s25 = sphi 0, %s24
    %s41 = sphi 0, %s25
    %s45 = sphi 0, %s45
    %s47 = sphi 0, %s45
    %s48 = sphi 0, %s47
    %s62 = sphi 0, %s48
    %s66 = sphi 0, %s66
    %s68 = sphi 0, %s66
    %s69 = sphi 0, %s68
    %s83 = sphi 0, %s69
    %s87 = sphi 0, %s87
    %s89 = sphi 0, %s87
    %s90 = sphi 0, %s89
    %s104 = sphi 0, %s90
    %s108 = sphi 0, %s108
    %s110 = sphi 0, %s108
    %s111 = sphi 0, %s110
    %s125 = sphi 0, %s111
    %s131 = sphi 0, %s133
    %s134 = sphi 0, %s131
    %s135 = sphi 0, %s134
    %s151 = sphi 0, %s135
  $region4: #{actor_forward.1} parent=0 // loop_header_branch
    %14 = sbr.rel (%p12) target = $region8
  $region5: #{actor_forward.1} parent=0 // loop_body
    %s16 = ssub.s32 %s11, 1
    %s17 = ssub.s32 %s11, 2
    %s18 = sadd.s32 %s11, 1
    %s19 = ssub.s32 %s11, %s18
    %p20 = scmp.eq.s32.totalorder %s19, 0
    %s22 = sadd.s32 %s21, 1
    %s23 = scalar_select %p20, %s21, %s22
    %p26 = pneg %p20
    %p27 = scmp.eq.s32.totalorder %s11, 1
    %p28 = por %p26, %p27
    %p29 = scmp.ne.s32.totalorder %s21, %s24
    %p30 = scmp.eq.s32.totalorder %s11, 0
    %p31 = por %p29, %p30
    %p32 = scmp.ne.s32.totalorder %s21, %s24
    %p33 = scmp.eq.s32.totalorder %s16, 1
    %p34 = por %p32, %p33
    %p35 = scmp.ne.s32.totalorder %s24, %s25
    %p36 = scmp.eq.s32.totalorder %s16, 0
    %p37 = por %p35, %p36
    %p38 = scmp.ne.s32.totalorder %s24, %s25
    %p39 = scmp.eq.s32.totalorder %s17, 1
    %p40 = por %p38, %p39
    %p42 = scmp.ne.s32.totalorder %s25, %s41
    %p43 = scmp.eq.s32.totalorder %s17, 0
    %p44 = por %p42, %p43
    %s46 = sadd.s32 %s45, 1
    %p49 = scmp.eq.s32.totalorder %s11, 1
    %p50 = scmp.ne.s32.totalorder %s45, %s47
    %p51 = scmp.eq.s32.totalorder %s11, 0
    %p52 = por %p50, %p51
    %p53 = scmp.ne.s32.totalorder %s45, %s47
    %p54 = scmp.eq.s32.totalorder %s16, 1
    %p55 = por %p53, %p54
    %p56 = scmp.ne.s32.totalorder %s47, %s48
    %p57 = scmp.eq.s32.totalorder %s16, 0
    %p58 = por %p56, %p57
    %p59 = scmp.ne.s32.totalorder %s47, %s48
    %p60 = scmp.eq.s32.totalorder %s17, 1
    %p61 = por %p59, %p60
    %p63 = scmp.ne.s32.totalorder %s48, %s62
    %p64 = scmp.eq.s32.totalorder %s17, 0
    %p65 = por %p63, %p64
    %s67 = sadd.s32 %s66, 1
    %p70 = scmp.eq.s32.totalorder %s11, 1
    %p71 = scmp.ne.s32.totalorder %s66, %s68
    %p72 = scmp.eq.s32.totalorder %s11, 0
    %p73 = por %p71, %p72
    %p74 = scmp.ne.s32.totalorder %s66, %s68
    %p75 = scmp.eq.s32.totalorder %s16, 1
    %p76 = por %p74, %p75
    %p77 = scmp.ne.s32.totalorder %s68, %s69
    %p78 = scmp.eq.s32.totalorder %s16, 0
    %p79 = por %p77, %p78
    %p80 = scmp.ne.s32.totalorder %s68, %s69
    %p81 = scmp.eq.s32.totalorder %s17, 1
    %p82 = por %p80, %p81
    %p84 = scmp.ne.s32.totalorder %s69, %s83
    %p85 = scmp.eq.s32.totalorder %s17, 0
    %p86 = por %p84, %p85
    %s88 = sadd.s32 %s87, 1
    %p91 = scmp.eq.s32.totalorder %s11, 1
    %p92 = scmp.ne.s32.totalorder %s87, %s89
    %p93 = scmp.eq.s32.totalorder %s11, 0
    %p94 = por %p92, %p93
    %p95 = scmp.ne.s32.totalorder %s87, %s89
    %p96 = scmp.eq.s32.totalorder %s16, 1
    %p97 = por %p95, %p96
    %p98 = scmp.ne.s32.totalorder %s89, %s90
    %p99 = scmp.eq.s32.totalorder %s16, 0
    %p100 = por %p98, %p99
    %p101 = scmp.ne.s32.totalorder %s89, %s90
    %p102 = scmp.eq.s32.totalorder %s17, 1
    %p103 = por %p101, %p102
    %p105 = scmp.ne.s32.totalorder %s90, %s104
    %p106 = scmp.eq.s32.totalorder %s17, 0
    %p107 = por %p105, %p106
    %s109 = sadd.s32 %s108, 1
    %p112 = scmp.eq.s32.totalorder %s11, 1
    %p113 = scmp.ne.s32.totalorder %s108, %s110
    %p114 = scmp.eq.s32.totalorder %s11, 0
    %p115 = por %p113, %p114
    %p116 = scmp.ne.s32.totalorder %s108, %s110
    %p117 = scmp.eq.s32.totalorder %s16, 1
    %p118 = por %p116, %p117
    %p119 = scmp.ne.s32.totalorder %s110, %s111
    %p120 = scmp.eq.s32.totalorder %s16, 0
    %p121 = por %p119, %p120
    %p122 = scmp.ne.s32.totalorder %s110, %s111
    %p123 = scmp.eq.s32.totalorder %s17, 1
    %p124 = por %p122, %p123
    %p126 = scmp.ne.s32.totalorder %s111, %s125
    %p127 = scmp.eq.s32.totalorder %s17, 0
    %p128 = por %p126, %p127
    %s129 = ssub.s32 %s11, %s18
    %p130 = scmp.eq.s32.totalorder %s129, 0
    %s132 = sadd.s32 %s131, 1
    %s133 = scalar_select %p130, %s131, %s132
    %p136 = pneg %p130
    %p137 = scmp.eq.s32.totalorder %s11, 1
    %p138 = por %p136, %p137
    %p139 = scmp.ne.s32.totalorder %s131, %s134
    %p140 = scmp.eq.s32.totalorder %s11, 0
    %p141 = por %p139, %p140
    %p142 = scmp.ne.s32.totalorder %s131, %s134
    %p143 = scmp.eq.s32.totalorder %s16, 1
    %p144 = por %p142, %p143
    %p145 = scmp.ne.s32.totalorder %s134, %s135
    %p146 = scmp.eq.s32.totalorder %s16, 0
    %p147 = por %p145, %p146
    %p148 = scmp.ne.s32.totalorder %s134, %s135
    %p149 = scmp.eq.s32.totalorder %s17, 1
    %p150 = por %p148, %p149
    %p152 = scmp.ne.s32.totalorder %s135, %s151
    %p153 = scmp.eq.s32.totalorder %s17, 0
    %p154 = por %p152, %p153
    %p155 = scmp.le.s32.totalorder 1, %s11
    %p156 = scmp.lt.s32.totalorder %s11, 3
    %p157 = pnand %p155, %p156
    %p158 = pneg %p157
    // Predicated region
    $region9: #{actor_forward.1} parent=5 // pred_check
      _
    $region10: #{actor_forward.1} parent=5 // pred_check_branch
      %160 = sbr.rel (%p157) target = $region12
    $region11: #{actor_forward.1} parent=5 // pred_region
      %s161 = ssub.s32 %s11, 1
      // Predicated region
      $region13: #{actor_forward.1} parent=11 // pred_check
        %p162 = pneg %p58
      $region14: #{actor_forward.1} parent=11 // pred_check_branch
        %164 = sbr.rel (%p162) target = $region16
      $region15: #{actor_forward.1} parent=11 // pred_region
        _
      $region16: #{actor_forward.1} parent=11 // pred_fallthru
        _
      // Predicated region
      $region17: #{actor_forward.1} parent=11 // pred_check
        %p165 = pneg %p79
      $region18: #{actor_forward.1} parent=11 // pred_check_branch
        %167 = sbr.rel (%p165) target = $region20
      $region19: #{actor_forward.1} parent=11 // pred_region
        _
      $region20: #{actor_forward.1} parent=11 // pred_fallthru
        _
      // Predicated region
      $region21: #{actor_forward.1} parent=11 // pred_check
        %p168 = pneg %p100
      $region22: #{actor_forward.1} parent=11 // pred_check_branch
        %170 = sbr.rel (%p168) target = $region24
      $region23: #{actor_forward.1} parent=11 // pred_region
        _
      $region24: #{actor_forward.1} parent=11 // pred_fallthru
        _
      // Predicated region
      $region25: #{actor_forward.1} parent=11 // pred_check
        %p171 = pneg %p121
      $region26: #{actor_forward.1} parent=11 // pred_check_branch
        %173 = sbr.rel (%p171) target = $region28
      $region27: #{actor_forward.1} parent=11 // pred_region
        _
      $region28: #{actor_forward.1} parent=11 // pred_fallthru
        _
    $region12: #{actor_forward.1} parent=5 // pred_fallthru
      _
    %p174 = scmp.lt.s32.totalorder %s11, 2
    // Predicated region
    $region29: #{actor_forward.1} parent=5 // pred_check
      %p175 = pneg %p174
    $region30: #{actor_forward.1} parent=5 // pred_check_branch
      %177 = sbr.rel (%p175) target = $region32
    $region31: #{actor_forward.1} parent=5 // pred_region
      // Predicated region
      $region33: #{actor_forward.1} parent=31 // pred_check
        %p178 = pneg %p31
      $region34: #{actor_forward.1} parent=31 // pred_check_branch
        %180 = sbr.rel (%p178) target = $region36
      $region35: #{actor_forward.1} parent=31 // pred_region
        %s181 = smul.u32 64, %s11
        %p182 = scmp.lt.s32.totalorder %s181, 127
        %s183 = scalar_select %p182, %s181, 127
        %s184 = smul.addr %s183, 8
        %s185 = scalar_lea.vmem %s0, %s184
        %s186 = smul.u32 64, %s11
      $region36: #{actor_forward.1} parent=31 // pred_fallthru
        _
    $region32: #{actor_forward.1} parent=5 // pred_fallthru
      _
    %p187 = scmp.le.s32.totalorder 1, %s11
    %p188 = scmp.lt.s32.totalorder %s11, 3
    %p189 = pnand %p187, %p188
    %p190 = pneg %p189
    // Predicated region
    $region37: #{actor_forward.1} parent=5 // pred_check
      _
    $region38: #{actor_forward.1} parent=5 // pred_check_branch
      %192 = sbr.rel (%p189) target = $region40
    $region39: #{actor_forward.1} parent=5 // pred_region
      %s193 = ssub.s32 %s11, 1
      %s194 = smul.u32 64, %s16
      %p195 = scmp.lt.s32.totalorder %s194, 127
      %s196 = scalar_select %p195, %s194, 127
      %s197 = smul.addr %s196, 8
      %s198 = scalar_lea.vmem %s0, %s197
      %p199 = pneg %p37
      %p200 = pneg %p34
      %p201 = pneg %p58
      %p202 = pneg %p55
      %p203 = pneg %p79
      %p204 = pneg %p76
      %p205 = pneg %p100
      %p206 = pneg %p97
      %p207 = pneg %p121
      %p208 = pneg %p118
      %p209 = pneg %p147
      %p210 = pneg %p144
      %s211 = smul.u32 64, %s16
      %p212 = scmp.lt.s32.totalorder %s211, 127
      %s213 = scalar_select %p212, %s211, 127
      %s214 = smul.addr %s213, 8
      %s215 = scalar_lea.vmem %s5, %s214
      %s216 = smul.u32 64, %s16
      %p217 = scmp.lt.s32.totalorder %s216, 127
      %s218 = scalar_select %p217, %s216, 127
      %s219 = smul.addr %s218, 8
      %s220 = scalar_lea.vmem %s0, %s219
      %s221 = smul.u32 64, %s16
      %s222 = smul.u32 64, %s16
      %p223 = scmp.lt.s32.totalorder %s222, 127
      %s224 = scalar_select %p223, %s222, 127
      %s225 = smul.addr %s224, 8
      %s226 = scalar_lea.vmem %s5, %s225
      %s227 = smul.u32 64, %s16
      %v228 = vld [vmem:[%s220] sm:$0xff]
      %v229 = vld [vmem:[%s220 + $0x8] sm:$0xff]
      %v230 = vld [vmem:[%s220 + $0x10] sm:$0xff]
      %v231 = vld [vmem:[%s220 + $0x18] sm:$0xff]
      %v232 = vld [vmem:[%s220 + $0x20] sm:$0xff]
      %v233 = vld [vmem:[%s220 + $0x28] sm:$0xff]
      %v234 = vld [vmem:[%s220 + $0x30] sm:$0xff]
      %v235 = vld [vmem:[%s220 + $0x38] sm:$0xff]
      %v236 = vld [vmem:[%s220 + $0x40] sm:$0xff]
      %v237 = vld [vmem:[%s220 + $0x48] sm:$0xff]
      %v238 = vld [vmem:[%s220 + $0x50] sm:$0xff]
      %v239 = vld [vmem:[%s220 + $0x58] sm:$0xff]
      %v240 = vld [vmem:[%s220 + $0x60] sm:$0xff]
      %v241 = vld [vmem:[%s220 + $0x68] sm:$0xff]
      %v242 = vld [vmem:[%s220 + $0x70] sm:$0xff]
      %v243 = vld [vmem:[%s220 + $0x78] sm:$0xff]
      %v244 = vld [vmem:[%s220 + $0x80] sm:$0xff]
      %v245 = vld [vmem:[%s220 + $0x88] sm:$0xff]
      %v246 = vld [vmem:[%s220 + $0x90] sm:$0xff]
      %v247 = vld [vmem:[%s220 + $0x98] sm:$0xff]
      %v248 = vld [vmem:[%s220 + $0xa0] sm:$0xff]
      %v249 = vld [vmem:[%s220 + $0xa8] sm:$0xff]
      %v250 = vld [vmem:[%s220 + $0xb0] sm:$0xff]
      %v251 = vld [vmem:[%s220 + $0xb8] sm:$0xff]
      %v252 = vld [vmem:[%s220 + $0xc0] sm:$0xff]
      %v253 = vld [vmem:[%s220 + $0xc8] sm:$0xff]
      %v254 = vld [vmem:[%s220 + $0xd0] sm:$0xff]
      %v255 = vld [vmem:[%s220 + $0xd8] sm:$0xff]
      %v256 = vld [vmem:[%s220 + $0xe0] sm:$0xff]
      %v257 = vld [vmem:[%s220 + $0xe8] sm:$0xff]
      %v258 = vld [vmem:[%s220 + $0xf0] sm:$0xff]
      %v259 = vld [vmem:[%s220 + $0xf8] sm:$0xff]
      %v260 = vld [vmem:[%s220 + $0x100] sm:$0xff]
      %v261 = vld [vmem:[%s220 + $0x108] sm:$0xff]
      %v262 = vld [vmem:[%s220 + $0x110] sm:$0xff]
      %v263 = vld [vmem:[%s220 + $0x118] sm:$0xff]
      %v264 = vld [vmem:[%s220 + $0x120] sm:$0xff]
      %v265 = vld [vmem:[%s220 + $0x128] sm:$0xff]
      %v266 = vld [vmem:[%s220 + $0x130] sm:$0xff]
      %v267 = vld [vmem:[%s220 + $0x138] sm:$0xff]
      %v268 = vld [vmem:[%s220 + $0x140] sm:$0xff]
      %v269 = vld [vmem:[%s220 + $0x148] sm:$0xff]
      %v270 = vld [vmem:[%s220 + $0x150] sm:$0xff]
      %v271 = vld [vmem:[%s220 + $0x158] sm:$0xff]
      %v272 = vld [vmem:[%s220 + $0x160] sm:$0xff]
      %v273 = vld [vmem:[%s220 + $0x168] sm:$0xff]
      %v274 = vld [vmem:[%s220 + $0x170] sm:$0xff]
      %v275 = vld [vmem:[%s220 + $0x178] sm:$0xff]
      %v276 = vld [vmem:[%s220 + $0x180] sm:$0xff]
      %v277 = vld [vmem:[%s220 + $0x188] sm:$0xff]
      %v278 = vld [vmem:[%s220 + $0x190] sm:$0xff]
      %v279 = vld [vmem:[%s220 + $0x198] sm:$0xff]
      %v280 = vld [vmem:[%s220 + $0x1a0] sm:$0xff]
      %v281 = vld [vmem:[%s220 + $0x1a8] sm:$0xff]
      %v282 = vld [vmem:[%s220 + $0x1b0] sm:$0xff]
      %v283 = vld [vmem:[%s220 + $0x1b8] sm:$0xff]
      %v284 = vld [vmem:[%s220 + $0x1c0] sm:$0xff]
      %v285 = vld [vmem:[%s220 + $0x1c8] sm:$0xff]
      %v286 = vld [vmem:[%s220 + $0x1d0] sm:$0xff]
      %v287 = vld [vmem:[%s220 + $0x1d8] sm:$0xff]
      %v288 = vld [vmem:[%s220 + $0x1e0] sm:$0xff]
      %v289 = vld [vmem:[%s220 + $0x1e8] sm:$0xff]
      %v290 = vld [vmem:[%s220 + $0x1f0] sm:$0xff]
      %v291 = vld [vmem:[%s220 + $0x1f8] sm:$0xff]
      %v292 = vld [vmem:[%s1] sm:$0xf]
      %v293 = vld [vmem:[%s2] sm:$0x1]
      %v295 = vlaneseq
      %v296 = vshrl.u32 %v295, 7
      %v297 = vsub.s32 0, %v296
      %v298 = vrot.slane %v293, %v297
      %vm300 = vcmask 31744
      %v302 = vsel %vm300, %v228, 0
      %v305 = vsel %vm300, %v229, 0
      %v308 = vsel %vm300, %v230, 0
      %v311 = vsel %vm300, %v231, 0
      %v314 = vsel %vm300, %v232, 0
      %v317 = vsel %vm300, %v233, 0
      %v320 = vsel %vm300, %v234, 0
      %v323 = vsel %vm300, %v235, 0
      %v326 = vsel %vm300, %v236, 0
      %v329 = vsel %vm300, %v237, 0
      %v332 = vsel %vm300, %v238, 0
      %v335 = vsel %vm300, %v239, 0
      %v338 = vsel %vm300, %v240, 0
      %v341 = vsel %vm300, %v241, 0
      %v344 = vsel %vm300, %v242, 0
      %v347 = vsel %vm300, %v243, 0
      %v350 = vsel %vm300, %v244, 0
      %v353 = vsel %vm300, %v245, 0
      %v356 = vsel %vm300, %v246, 0
      %v359 = vsel %vm300, %v247, 0
      %v362 = vsel %vm300, %v248, 0
      %v365 = vsel %vm300, %v249, 0
      %v368 = vsel %vm300, %v250, 0
      %v371 = vsel %vm300, %v251, 0
      %v374 = vsel %vm300, %v252, 0
      %v377 = vsel %vm300, %v253, 0
      %v380 = vsel %vm300, %v254, 0
      %v383 = vsel %vm300, %v255, 0
      %v386 = vsel %vm300, %v256, 0
      %v389 = vsel %vm300, %v257, 0
      %v392 = vsel %vm300, %v258, 0
      %v395 = vsel %vm300, %v259, 0
      %v398 = vsel %vm300, %v260, 0
      %v401 = vsel %vm300, %v261, 0
      %v404 = vsel %vm300, %v262, 0
      %v407 = vsel %vm300, %v263, 0
      %v410 = vsel %vm300, %v264, 0
      %v413 = vsel %vm300, %v265, 0
      %v416 = vsel %vm300, %v266, 0
      %v419 = vsel %vm300, %v267, 0
      %v422 = vsel %vm300, %v268, 0
      %v425 = vsel %vm300, %v269, 0
      %v428 = vsel %vm300, %v270, 0
      %v431 = vsel %vm300, %v271, 0
      %v434 = vsel %vm300, %v272, 0
      %v437 = vsel %vm300, %v273, 0
      %v440 = vsel %vm300, %v274, 0
      %v443 = vsel %vm300, %v275, 0
      %v446 = vsel %vm300, %v276, 0
      %v449 = vsel %vm300, %v277, 0
      %v452 = vsel %vm300, %v278, 0
      %v455 = vsel %vm300, %v279, 0
      %v458 = vsel %vm300, %v280, 0
      %v461 = vsel %vm300, %v281, 0
      %v464 = vsel %vm300, %v282, 0
      %v467 = vsel %vm300, %v283, 0
      %v470 = vsel %vm300, %v284, 0
      %v473 = vsel %vm300, %v285, 0
      %v476 = vsel %vm300, %v286, 0
      %v479 = vsel %vm300, %v287, 0
      %v482 = vsel %vm300, %v288, 0
      %v485 = vsel %vm300, %v289, 0
      %v488 = vsel %vm300, %v290, 0
      %v491 = vsel %vm300, %v291, 0
      %vm493 = vcmask 1043456
      %v495 = vsel %vm493, %v292, 0
      %497 = vmatprep.subr.mxu0 0.0
      %498 = vmatpush1.msra.mxu0 %v495
      %499 = vmatprep.subr.mxu0 0.0
      %500 = vmatpush1.msra.mxu0 0.0
      %501 = vmatprep.subr.mxu0 0.0
      %502 = vmatpush1.msra.mxu0 0.0
      %503 = vmatprep.subr.mxu0 0.0
      %504 = vmatpush1.msra.mxu0 0.0
      %505 = vmatprep.subr.mxu0 0.0
      %506 = vmatpush1.msra.mxu0 0.0
      %507 = vmatprep.subr.mxu0 0.0
      %508 = vmatpush1.msra.mxu0 0.0
      %509 = vmatprep.subr.mxu0 0.0
      %510 = vmatpush1.msra.mxu0 0.0
      %511 = vmatprep.subr.mxu0 0.0
      %512 = vmatpush1.msra.mxu0 0.0
      %513 = vmatprep.subr.mxu0 0.0
      %514 = vmatpush1.msra.mxu0 0.0
      %515 = vmatprep.subr.mxu0 0.0
      %516 = vmatpush1.msra.mxu0 0.0
      %517 = vmatprep.subr.mxu0 0.0
      %518 = vmatpush1.msra.mxu0 0.0
      %519 = vmatprep.subr.mxu0 0.0
      %520 = vmatpush1.msra.mxu0 0.0
      %521 = vmatprep.subr.mxu0 0.0
      %522 = vmatpush1.msra.mxu0 0.0
      %523 = vmatprep.subr.mxu0 0.0
      %524 = vmatpush1.msra.mxu0 0.0
      %525 = vmatprep.subr.mxu0 0.0
      %526 = vmatpush1.msra.mxu0 0.0
      %527 = vmatprep.subr.mxu0 0.0
      %528 = vmatpush1.msra.mxu0 0.0
      %529 = vmatprep.subr.mxu0 0.0
      %530 = vmatpush1.msra.mxu0 0.0
      %531 = vmatprep.subr.mxu0 0.0
      %532 = vmatpush1.msra.mxu0 0.0
      %533 = vmatprep.subr.mxu0 0.0
      %534 = vmatpush1.msra.mxu0 0.0
      %535 = vmatprep.subr.mxu0 0.0
      %536 = vmatpush1.msra.mxu0 0.0
      %537 = vmatprep.subr.mxu0 0.0
      %538 = vmatpush1.msra.mxu0 0.0
      %539 = vmatprep.subr.mxu0 0.0
      %540 = vmatpush1.msra.mxu0 0.0
      %541 = vmatprep.subr.mxu0 0.0
      %542 = vmatpush1.msra.mxu0 0.0
      %543 = vmatprep.subr.mxu0 0.0
      %544 = vmatpush1.msra.mxu0 0.0
      %545 = vmatprep.subr.mxu0 0.0
      %546 = vmatpush1.msra.mxu0 0.0
      %547 = vmatprep.subr.mxu0 0.0
      %548 = vmatpush1.msra.mxu0 0.0
      %549 = vmatprep.subr.mxu0 0.0
      %550 = vmatpush1.msra.mxu0 0.0
      %551 = vmatprep.subr.mxu0 0.0
      %552 = vmatpush1.msra.mxu0 0.0
      %553 = vmatprep.subr.mxu0 0.0
      %554 = vmatpush1.msra.mxu0 0.0
      %555 = vmatprep.subr.mxu0 0.0
      %556 = vmatpush1.msra.mxu0 0.0
      %557 = vmatprep.subr.mxu0 0.0
      %558 = vmatpush1.msra.mxu0 0.0
      %559 = vmatprep.subr.mxu0 0.0
      %560 = vmatpush1.msra.mxu0 0.0
      %561 = vmatprep.mubr.f32.mxu0 0.0
      %562 = vmatmul.mubr.f32.gmra.mrb[0].mxu0 %v302
      %v563 = vpop.f32.mrb[0].mxu0
      %v564 = vadd.f32 %v298, %v563
      %v565 = vpop.f32.mrb[0].mxu0
      %566 = vmatprep.mubr.f32.mxu0 0.0
      %567 = vmatmul.mubr.f32.gmra.mrb[0].mxu0 %v305
      %v568 = vpop.f32.mrb[0].mxu0
      %v569 = vadd.f32 %v298, %v568
      %v570 = vpop.f32.mrb[0].mxu0
      %571 = vmatprep.mubr.f32.mxu0 0.0
      %572 = vmatmul.mubr.f32.gmra.mrb[0].mxu0 %v308
      %v573 = vpop.f32.mrb[0].mxu0
      %v574 = vadd.f32 %v298, %v573
      %v575 = vpop.f32.mrb[0].mxu0
      %576 = vmatprep.mubr.f32.mxu0 0.0
      %577 = vmatmul.mubr.f32.gmra.mrb[0].mxu0 %v311
      %v578 = vpop.f32.mrb[0].mxu0
      %v579 = vadd.f32 %v298, %v578
      %v580 = vpop.f32.mrb[0].mxu0
      %581 = vmatprep.mubr.f32.mxu0 0.0
      %582 = vmatmul.mubr.f32.gmra.mrb[0].mxu0 %v314
      %v583 = vpop.f32.mrb[0].mxu0
      %v584 = vadd.f32 %v298, %v583
      %v585 = vpop.f32.mrb[0].mxu0
      %586 = vmatprep.mubr.f32.mxu0 0.0
      %587 = vmatmul.mubr.f32.gmra.mrb[0].mxu0 %v317
      %v588 = vpop.f32.mrb[0].mxu0
      %v589 = vadd.f32 %v298, %v588
      %v590 = vpop.f32.mrb[0].mxu0
      %591 = vmatprep.mubr.f32.mxu0 0.0
      %592 = vmatmul.mubr.f32.gmra.mrb[0].mxu0 %v320
      %v593 = vpop.f32.mrb[0].mxu0
      %v594 = vadd.f32 %v298, %v593
      %v595 = vpop.f32.mrb[0].mxu0
      %596 = vmatprep.mubr.f32.mxu0 0.0
      %597 = vmatmul.mubr.f32.gmra.mrb[0].mxu0 %v323
      %v598 = vpop.f32.mrb[0].mxu0
      %v599 = vadd.f32 %v298, %v598
      %v600 = vpop.f32.mrb[0].mxu0
      %601 = vmatprep.mubr.f32.mxu0 0.0
      %602 = vmatmul.mubr.f32.gmra.mrb[0].mxu0 %v326
      %v603 = vpop.f32.mrb[0].mxu0
      %v604 = vadd.f32 %v298, %v603
      %v605 = vpop.f32.mrb[0].mxu0
      %606 = vmatprep.mubr.f32.mxu0 0.0
      %607 = vmatmul.mubr.f32.gmra.mrb[0].mxu0 %v329
      %v608 = vpop.f32.mrb[0].mxu0
      %v609 = vadd.f32 %v298, %v608
      %v610 = vpop.f32.mrb[0].mxu0
      %611 = vmatprep.mubr.f32.mxu0 0.0
      %612 = vmatmul.mubr.f32.gmra.mrb[0].mxu0 %v332
      %v613 = vpop.f32.mrb[0].mxu0
      %v614 = vadd.f32 %v298, %v613
      %v615 = vpop.f32.mrb[0].mxu0
      %616 = vmatprep.mubr.f32.mxu0 0.0
      %617 = vmatmul.mubr.f32.gmra.mrb[0].mxu0 %v335
      %v618 = vpop.f32.mrb[0].mxu0
      %v619 = vadd.f32 %v298, %v618
      %v620 = vpop.f32.mrb[0].mxu0
      %621 = vmatprep.mubr.f32.mxu0 0.0
      %622 = vmatmul.mubr.f32.gmra.mrb[0].mxu0 %v338
      %v623 = vpop.f32.mrb[0].mxu0
      %v624 = vadd.f32 %v298, %v623
      %v625 = vpop.f32.mrb[0].mxu0
      %626 = vmatprep.mubr.f32.mxu0 0.0
      %627 = vmatmul.mubr.f32.gmra.mrb[0].mxu0 %v341
      %v628 = vpop.f32.mrb[0].mxu0
      %v629 = vadd.f32 %v298, %v628
      %v630 = vpop.f32.mrb[0].mxu0
      %631 = vmatprep.mubr.f32.mxu0 0.0
      %632 = vmatmul.mubr.f32.gmra.mrb[0].mxu0 %v344
      %v633 = vpop.f32.mrb[0].mxu0
      %v634 = vadd.f32 %v298, %v633
      %v635 = vpop.f32.mrb[0].mxu0
      %636 = vmatprep.mubr.f32.mxu0 0.0
      %637 = vmatmul.mubr.f32.gmra.mrb[0].mxu0 %v347
      %v638 = vpop.f32.mrb[0].mxu0
      %v639 = vadd.f32 %v298, %v638
      %v640 = vpop.f32.mrb[0].mxu0
      %641 = vmatprep.mubr.f32.mxu0 0.0
      %642 = vmatmul.mubr.f32.gmra.mrb[0].mxu0 %v350
      %v643 = vpop.f32.mrb[0].mxu0
      %v644 = vadd.f32 %v298, %v643
      %v645 = vpop.f32.mrb[0].mxu0
      %646 = vmatprep.mubr.f32.mxu0 0.0
      %647 = vmatmul.mubr.f32.gmra.mrb[0].mxu0 %v353
      %v648 = vpop.f32.mrb[0].mxu0
      %v649 = vadd.f32 %v298, %v648
      %v650 = vpop.f32.mrb[0].mxu0
      %651 = vmatprep.mubr.f32.mxu0 0.0
      %652 = vmatmul.mubr.f32.gmra.mrb[0].mxu0 %v356
      %v653 = vpop.f32.mrb[0].mxu0
      %v654 = vadd.f32 %v298, %v653
      %v655 = vpop.f32.mrb[0].mxu0
      %656 = vmatprep.mubr.f32.mxu0 0.0
      %657 = vmatmul.mubr.f32.gmra.mrb[0].mxu0 %v359
      %v658 = vpop.f32.mrb[0].mxu0
      %v659 = vadd.f32 %v298, %v658
      %v660 = vpop.f32.mrb[0].mxu0
      %661 = vmatprep.mubr.f32.mxu0 0.0
      %662 = vmatmul.mubr.f32.gmra.mrb[0].mxu0 %v362
      %v663 = vpop.f32.mrb[0].mxu0
      %v664 = vadd.f32 %v298, %v663
      %v665 = vpop.f32.mrb[0].mxu0
      %666 = vmatprep.mubr.f32.mxu0 0.0
      %667 = vmatmul.mubr.f32.gmra.mrb[0].mxu0 %v365
      %v668 = vpop.f32.mrb[0].mxu0
      %v669 = vadd.f32 %v298, %v668
      %v670 = vpop.f32.mrb[0].mxu0
      %671 = vmatprep.mubr.f32.mxu0 0.0
      %672 = vmatmul.mubr.f32.gmra.mrb[0].mxu0 %v368
      %v673 = vpop.f32.mrb[0].mxu0
      %v674 = vadd.f32 %v298, %v673
      %v675 = vpop.f32.mrb[0].mxu0
      %676 = vmatprep.mubr.f32.mxu0 0.0
      %677 = vmatmul.mubr.f32.gmra.mrb[0].mxu0 %v371
      %v678 = vpop.f32.mrb[0].mxu0
      %v679 = vadd.f32 %v298, %v678
      %v680 = vpop.f32.mrb[0].mxu0
      %681 = vmatprep.mubr.f32.mxu0 0.0
      %682 = vmatmul.mubr.f32.gmra.mrb[0].mxu0 %v374
      %v683 = vpop.f32.mrb[0].mxu0
      %v684 = vadd.f32 %v298, %v683
      %v685 = vpop.f32.mrb[0].mxu0
      %686 = vmatprep.mubr.f32.mxu0 0.0
      %687 = vmatmul.mubr.f32.gmra.mrb[0].mxu0 %v377
      %v688 = vpop.f32.mrb[0].mxu0
      %v689 = vadd.f32 %v298, %v688
      %v690 = vpop.f32.mrb[0].mxu0
      %691 = vmatprep.mubr.f32.mxu0 0.0
      %692 = vmatmul.mubr.f32.gmra.mrb[0].mxu0 %v380
      %v693 = vpop.f32.mrb[0].mxu0
      %v694 = vadd.f32 %v298, %v693
      %v695 = vpop.f32.mrb[0].mxu0
      %696 = vmatprep.mubr.f32.mxu0 0.0
      %697 = vmatmul.mubr.f32.gmra.mrb[0].mxu0 %v383
      %v698 = vpop.f32.mrb[0].mxu0
      %v699 = vadd.f32 %v298, %v698
      %v700 = vpop.f32.mrb[0].mxu0
      %701 = vmatprep.mubr.f32.mxu0 0.0
      %702 = vmatmul.mubr.f32.gmra.mrb[0].mxu0 %v386
      %v703 = vpop.f32.mrb[0].mxu0
      %v704 = vadd.f32 %v298, %v703
      %v705 = vpop.f32.mrb[0].mxu0
      %706 = vmatprep.mubr.f32.mxu0 0.0
      %707 = vmatmul.mubr.f32.gmra.mrb[0].mxu0 %v389
      %v708 = vpop.f32.mrb[0].mxu0
      %v709 = vadd.f32 %v298, %v708
      %v710 = vpop.f32.mrb[0].mxu0
      %711 = vmatprep.mubr.f32.mxu0 0.0
      %712 = vmatmul.mubr.f32.gmra.mrb[0].mxu0 %v392
      %v713 = vpop.f32.mrb[0].mxu0
      %v714 = vadd.f32 %v298, %v713
      %v715 = vpop.f32.mrb[0].mxu0
      %716 = vmatprep.mubr.f32.mxu0 0.0
      %717 = vmatmul.mubr.f32.gmra.mrb[0].mxu0 %v395
      %v718 = vpop.f32.mrb[0].mxu0
      %v719 = vadd.f32 %v298, %v718
      %v720 = vpop.f32.mrb[0].mxu0
      %721 = vmatprep.mubr.f32.mxu0 0.0
      %722 = vmatmul.mubr.f32.gmra.mrb[0].mxu0 %v398
      %v723 = vpop.f32.mrb[0].mxu0
      %v724 = vadd.f32 %v298, %v723
      %v725 = vpop.f32.mrb[0].mxu0
      %726 = vmatprep.mubr.f32.mxu0 0.0
      %727 = vmatmul.mubr.f32.gmra.mrb[0].mxu0 %v401
      %v728 = vpop.f32.mrb[0].mxu0
      %v729 = vadd.f32 %v298, %v728
      %v730 = vpop.f32.mrb[0].mxu0
      %731 = vmatprep.mubr.f32.mxu0 0.0
      %732 = vmatmul.mubr.f32.gmra.mrb[0].mxu0 %v404
      %v733 = vpop.f32.mrb[0].mxu0
      %v734 = vadd.f32 %v298, %v733
      %v735 = vpop.f32.mrb[0].mxu0
      %736 = vmatprep.mubr.f32.mxu0 0.0
      %737 = vmatmul.mubr.f32.gmra.mrb[0].mxu0 %v407
      %v738 = vpop.f32.mrb[0].mxu0
      %v739 = vadd.f32 %v298, %v738
      %v740 = vpop.f32.mrb[0].mxu0
      %741 = vmatprep.mubr.f32.mxu0 0.0
      %742 = vmatmul.mubr.f32.gmra.mrb[0].mxu0 %v410
      %v743 = vpop.f32.mrb[0].mxu0
      %v744 = vadd.f32 %v298, %v743
      %v745 = vpop.f32.mrb[0].mxu0
      %746 = vmatprep.mubr.f32.mxu0 0.0
      %747 = vmatmul.mubr.f32.gmra.mrb[0].mxu0 %v413
      %v748 = vpop.f32.mrb[0].mxu0
      %v749 = vadd.f32 %v298, %v748
      %v750 = vpop.f32.mrb[0].mxu0
      %751 = vmatprep.mubr.f32.mxu0 0.0
      %752 = vmatmul.mubr.f32.gmra.mrb[0].mxu0 %v416
      %v753 = vpop.f32.mrb[0].mxu0
      %v754 = vadd.f32 %v298, %v753
      %v755 = vpop.f32.mrb[0].mxu0
      %756 = vmatprep.mubr.f32.mxu0 0.0
      %757 = vmatmul.mubr.f32.gmra.mrb[0].mxu0 %v419
      %v758 = vpop.f32.mrb[0].mxu0
      %v759 = vadd.f32 %v298, %v758
      %v760 = vpop.f32.mrb[0].mxu0
      %761 = vmatprep.mubr.f32.mxu0 0.0
      %762 = vmatmul.mubr.f32.gmra.mrb[0].mxu0 %v422
      %v763 = vpop.f32.mrb[0].mxu0
      %v764 = vadd.f32 %v298, %v763
      %v765 = vpop.f32.mrb[0].mxu0
      %766 = vmatprep.mubr.f32.mxu0 0.0
      %767 = vmatmul.mubr.f32.gmra.mrb[0].mxu0 %v425
      %v768 = vpop.f32.mrb[0].mxu0
      %v769 = vadd.f32 %v298, %v768
      %v770 = vpop.f32.mrb[0].mxu0
      %771 = vmatprep.mubr.f32.mxu0 0.0
      %772 = vmatmul.mubr.f32.gmra.mrb[0].mxu0 %v428
      %v773 = vpop.f32.mrb[0].mxu0
      %v774 = vadd.f32 %v298, %v773
      %v775 = vpop.f32.mrb[0].mxu0
      %776 = vmatprep.mubr.f32.mxu0 0.0
      %777 = vmatmul.mubr.f32.gmra.mrb[0].mxu0 %v431
      %v778 = vpop.f32.mrb[0].mxu0
      %v779 = vadd.f32 %v298, %v778
      %v780 = vpop.f32.mrb[0].mxu0
      %781 = vmatprep.mubr.f32.mxu0 0.0
      %782 = vmatmul.mubr.f32.gmra.mrb[0].mxu0 %v434
      %v783 = vpop.f32.mrb[0].mxu0
      %v784 = vadd.f32 %v298, %v783
      %v785 = vpop.f32.mrb[0].mxu0
      %786 = vmatprep.mubr.f32.mxu0 0.0
      %787 = vmatmul.mubr.f32.gmra.mrb[0].mxu0 %v437
      %v788 = vpop.f32.mrb[0].mxu0
      %v789 = vadd.f32 %v298, %v788
      %v790 = vpop.f32.mrb[0].mxu0
      %791 = vmatprep.mubr.f32.mxu0 0.0
      %792 = vmatmul.mubr.f32.gmra.mrb[0].mxu0 %v440
      %v793 = vpop.f32.mrb[0].mxu0
      %v794 = vadd.f32 %v298, %v793
      %v795 = vpop.f32.mrb[0].mxu0
      %796 = vmatprep.mubr.f32.mxu0 0.0
      %797 = vmatmul.mubr.f32.gmra.mrb[0].mxu0 %v443
      %v798 = vpop.f32.mrb[0].mxu0
      %v799 = vadd.f32 %v298, %v798
      %v800 = vpop.f32.mrb[0].mxu0
      %801 = vmatprep.mubr.f32.mxu0 0.0
      %802 = vmatmul.mubr.f32.gmra.mrb[0].mxu0 %v446
      %v803 = vpop.f32.mrb[0].mxu0
      %v804 = vadd.f32 %v298, %v803
      %v805 = vpop.f32.mrb[0].mxu0
      %806 = vmatprep.mubr.f32.mxu0 0.0
      %807 = vmatmul.mubr.f32.gmra.mrb[0].mxu0 %v449
      %v808 = vpop.f32.mrb[0].mxu0
      %v809 = vadd.f32 %v298, %v808
      %v810 = vpop.f32.mrb[0].mxu0
      %811 = vmatprep.mubr.f32.mxu0 0.0
      %812 = vmatmul.mubr.f32.gmra.mrb[0].mxu0 %v452
      %v813 = vpop.f32.mrb[0].mxu0
      %v814 = vadd.f32 %v298, %v813
      %v815 = vpop.f32.mrb[0].mxu0
      %816 = vmatprep.mubr.f32.mxu0 0.0
      %817 = vmatmul.mubr.f32.gmra.mrb[0].mxu0 %v455
      %v818 = vpop.f32.mrb[0].mxu0
      %v819 = vadd.f32 %v298, %v818
      %v820 = vpop.f32.mrb[0].mxu0
      %821 = vmatprep.mubr.f32.mxu0 0.0
      %822 = vmatmul.mubr.f32.gmra.mrb[0].mxu0 %v458
      %v823 = vpop.f32.mrb[0].mxu0
      %v824 = vadd.f32 %v298, %v823
      %v825 = vpop.f32.mrb[0].mxu0
      %826 = vmatprep.mubr.f32.mxu0 0.0
      %827 = vmatmul.mubr.f32.gmra.mrb[0].mxu0 %v461
      %v828 = vpop.f32.mrb[0].mxu0
      %v829 = vadd.f32 %v298, %v828
      %v830 = vpop.f32.mrb[0].mxu0
      %831 = vmatprep.mubr.f32.mxu0 0.0
      %832 = vmatmul.mubr.f32.gmra.mrb[0].mxu0 %v464
      %v833 = vpop.f32.mrb[0].mxu0
      %v834 = vadd.f32 %v298, %v833
      %v835 = vpop.f32.mrb[0].mxu0
      %836 = vmatprep.mubr.f32.mxu0 0.0
      %837 = vmatmul.mubr.f32.gmra.mrb[0].mxu0 %v467
      %v838 = vpop.f32.mrb[0].mxu0
      %v839 = vadd.f32 %v298, %v838
      %v840 = vpop.f32.mrb[0].mxu0
      %841 = vmatprep.mubr.f32.mxu0 0.0
      %842 = vmatmul.mubr.f32.gmra.mrb[0].mxu0 %v470
      %v843 = vpop.f32.mrb[0].mxu0
      %v844 = vadd.f32 %v298, %v843
      %v845 = vpop.f32.mrb[0].mxu0
      %846 = vmatprep.mubr.f32.mxu0 0.0
      %847 = vmatmul.mubr.f32.gmra.mrb[0].mxu0 %v473
      %v848 = vpop.f32.mrb[0].mxu0
      %v849 = vadd.f32 %v298, %v848
      %v850 = vpop.f32.mrb[0].mxu0
      %851 = vmatprep.mubr.f32.mxu0 0.0
      %852 = vmatmul.mubr.f32.gmra.mrb[0].mxu0 %v476
      %v853 = vpop.f32.mrb[0].mxu0
      %v854 = vadd.f32 %v298, %v853
      %v855 = vpop.f32.mrb[0].mxu0
      %856 = vmatprep.mubr.f32.mxu0 0.0
      %857 = vmatmul.mubr.f32.gmra.mrb[0].mxu0 %v479
      %v858 = vpop.f32.mrb[0].mxu0
      %v859 = vadd.f32 %v298, %v858
      %v860 = vpop.f32.mrb[0].mxu0
      %861 = vmatprep.mubr.f32.mxu0 0.0
      %862 = vmatmul.mubr.f32.gmra.mrb[0].mxu0 %v482
      %v863 = vpop.f32.mrb[0].mxu0
      %v864 = vadd.f32 %v298, %v863
      %v865 = vpop.f32.mrb[0].mxu0
      %866 = vmatprep.mubr.f32.mxu0 0.0
      %867 = vmatmul.mubr.f32.gmra.mrb[0].mxu0 %v485
      %v868 = vpop.f32.mrb[0].mxu0
      %v869 = vadd.f32 %v298, %v868
      %v870 = vpop.f32.mrb[0].mxu0
      %871 = vmatprep.mubr.f32.mxu0 0.0
      %872 = vmatmul.mubr.f32.gmra.mrb[0].mxu0 %v488
      %v873 = vpop.f32.mrb[0].mxu0
      %v874 = vadd.f32 %v298, %v873
      %v875 = vpop.f32.mrb[0].mxu0
      %876 = vmatprep.mubr.f32.mxu0 0.0
      %877 = vmatmul.mubr.f32.gmra.mrb[0].mxu0 %v491
      %v878 = vpop.f32.mrb[0].mxu0
      %v879 = vadd.f32 %v298, %v878
      %v880 = vpop.f32.mrb[0].mxu0
      %881 = vdwg.mxu0
      %v882 = vmax.f32 %v564, 0.0
      %v883 = vmax.f32 %v569, 0.0
      %v884 = vmax.f32 %v574, 0.0
      %v885 = vmax.f32 %v579, 0.0
      %v886 = vmax.f32 %v584, 0.0
      %v887 = vmax.f32 %v589, 0.0
      %v888 = vmax.f32 %v594, 0.0
      %v889 = vmax.f32 %v599, 0.0
      %v890 = vmax.f32 %v604, 0.0
      %v891 = vmax.f32 %v609, 0.0
      %v892 = vmax.f32 %v614, 0.0
      %v893 = vmax.f32 %v619, 0.0
      %v894 = vmax.f32 %v624, 0.0
      %v895 = vmax.f32 %v629, 0.0
      %v896 = vmax.f32 %v634, 0.0
      %v897 = vmax.f32 %v639, 0.0
      %v898 = vmax.f32 %v644, 0.0
      %v899 = vmax.f32 %v649, 0.0
      %v900 = vmax.f32 %v654, 0.0
      %v901 = vmax.f32 %v659, 0.0
      %v902 = vmax.f32 %v664, 0.0
      %v903 = vmax.f32 %v669, 0.0
      %v904 = vmax.f32 %v674, 0.0
      %v905 = vmax.f32 %v679, 0.0
      %v906 = vmax.f32 %v684, 0.0
      %v907 = vmax.f32 %v689, 0.0
      %v908 = vmax.f32 %v694, 0.0
      %v909 = vmax.f32 %v699, 0.0
      %v910 = vmax.f32 %v704, 0.0
      %v911 = vmax.f32 %v709, 0.0
      %v912 = vmax.f32 %v714, 0.0
      %v913 = vmax.f32 %v719, 0.0
      %v914 = vmax.f32 %v724, 0.0
      %v915 = vmax.f32 %v729, 0.0
      %v916 = vmax.f32 %v734, 0.0
      %v917 = vmax.f32 %v739, 0.0
      %v918 = vmax.f32 %v744, 0.0
      %v919 = vmax.f32 %v749, 0.0
      %v920 = vmax.f32 %v754, 0.0
      %v921 = vmax.f32 %v759, 0.0
      %v922 = vmax.f32 %v764, 0.0
      %v923 = vmax.f32 %v769, 0.0
      %v924 = vmax.f32 %v774, 0.0
      %v925 = vmax.f32 %v779, 0.0
      %v926 = vmax.f32 %v784, 0.0
      %v927 = vmax.f32 %v789, 0.0
      %v928 = vmax.f32 %v794, 0.0
      %v929 = vmax.f32 %v799, 0.0
      %v930 = vmax.f32 %v804, 0.0
      %v931 = vmax.f32 %v809, 0.0
      %v932 = vmax.f32 %v814, 0.0
      %v933 = vmax.f32 %v819, 0.0
      %v934 = vmax.f32 %v824, 0.0
      %v935 = vmax.f32 %v829, 0.0
      %v936 = vmax.f32 %v834, 0.0
      %v937 = vmax.f32 %v839, 0.0
      %v938 = vmax.f32 %v844, 0.0
      %v939 = vmax.f32 %v849, 0.0
      %v940 = vmax.f32 %v854, 0.0
      %v941 = vmax.f32 %v859, 0.0
      %v942 = vmax.f32 %v864, 0.0
      %v943 = vmax.f32 %v869, 0.0
      %v944 = vmax.f32 %v874, 0.0
      %v945 = vmax.f32 %v879, 0.0
      %v946 = vld [vmem:[%s3] sm:$0xff]
      %v947 = vld [vmem:[%s3 + $0x8] sm:$0xff]
      %v948 = vld [vmem:[%s3 + $0x10] sm:$0xff]
      %v949 = vld [vmem:[%s3 + $0x18] sm:$0xff]
      %v950 = vld [vmem:[%s3 + $0x20] sm:$0xff]
      %v951 = vld [vmem:[%s3 + $0x28] sm:$0xff]
      %v952 = vld [vmem:[%s3 + $0x30] sm:$0xff]
      %v953 = vld [vmem:[%s3 + $0x38] sm:$0xff]
      %v954 = vld [vmem:[%s3 + $0x40] sm:$0xff]
      %v955 = vld [vmem:[%s3 + $0x48] sm:$0xff]
      %v956 = vld [vmem:[%s3 + $0x50] sm:$0xff]
      %v957 = vld [vmem:[%s3 + $0x58] sm:$0xff]
      %v958 = vld [vmem:[%s3 + $0x60] sm:$0xff]
      %v959 = vld [vmem:[%s3 + $0x68] sm:$0xff]
      %v960 = vld [vmem:[%s3 + $0x70] sm:$0xff]
      %v961 = vld [vmem:[%s3 + $0x78] sm:$0xff]
      %v962 = vld [vmem:[%s4] sm:$0x1]
      %v964 = vlaneseq
      %v965 = vshrl.u32 %v964, 7
      %v966 = vsub.s32 0, %v965
      %v967 = vrot.slane %v962, %v966
      %969 = vmatprep.subr.mxu0 0.0
      %970 = vmatpush1.msra.mxu0 %v946
      %971 = vmatprep.subr.mxu0 0.0
      %972 = vmatpush1.msra.mxu0 %v947
      %973 = vmatprep.subr.mxu0 0.0
      %974 = vmatpush1.msra.mxu0 %v948
      %975 = vmatprep.subr.mxu0 0.0
      %976 = vmatpush1.msra.mxu0 %v949
      %977 = vmatprep.subr.mxu0 0.0
      %978 = vmatpush1.msra.mxu0 %v950
      %979 = vmatprep.subr.mxu0 0.0
      %980 = vmatpush1.msra.mxu0 %v951
      %981 = vmatprep.subr.mxu0 0.0
      %982 = vmatpush1.msra.mxu0 %v952
      %983 = vmatprep.subr.mxu0 0.0
      %984 = vmatpush1.msra.mxu0 %v953
      %985 = vmatprep.subr.mxu0 0.0
      %986 = vmatpush1.msra.mxu0 %v954
      %987 = vmatprep.subr.mxu0 0.0
      %988 = vmatpush1.msra.mxu0 %v955
      %989 = vmatprep.subr.mxu0 0.0
      %990 = vmatpush1.msra.mxu0 %v956
      %991 = vmatprep.subr.mxu0 0.0
      %992 = vmatpush1.msra.mxu0 %v957
      %993 = vmatprep.subr.mxu0 0.0
      %994 = vmatpush1.msra.mxu0 %v958
      %995 = vmatprep.subr.mxu0 0.0
      %996 = vmatpush1.msra.mxu0 %v959
      %997 = vmatprep.subr.mxu0 0.0
      %998 = vmatpush1.msra.mxu0 %v960
      %999 = vmatprep.subr.mxu0 0.0
      %1000 = vmatpush1.msra.mxu0 %v961
      %1001 = vmatprep.subr.mxu0 0.0
      %1002 = vmatpush1.msra.mxu0 0.0
      %1003 = vmatprep.subr.mxu0 0.0
      %1004 = vmatpush1.msra.mxu0 0.0
      %1005 = vmatprep.subr.mxu0 0.0
      %1006 = vmatpush1.msra.mxu0 0.0
      %1007 = vmatprep.subr.mxu0 0.0
      %1008 = vmatpush1.msra.mxu0 0.0
      %1009 = vmatprep.subr.mxu0 0.0
      %1010 = vmatpush1.msra.mxu0 0.0
      %1011 = vmatprep.subr.mxu0 0.0
      %1012 = vmatpush1.msra.mxu0 0.0
      %1013 = vmatprep.subr.mxu0 0.0
      %1014 = vmatpush1.msra.mxu0 0.0
      %1015 = vmatprep.subr.mxu0 0.0
      %1016 = vmatpush1.msra.mxu0 0.0
      %1017 = vmatprep.subr.mxu0 0.0
      %1018 = vmatpush1.msra.mxu0 0.0
      %1019 = vmatprep.subr.mxu0 0.0
      %1020 = vmatpush1.msra.mxu0 0.0
      %1021 = vmatprep.subr.mxu0 0.0
      %1022 = vmatpush1.msra.mxu0 0.0
      %1023 = vmatprep.subr.mxu0 0.0
      %1024 = vmatpush1.msra.mxu0 0.0
      %1025 = vmatprep.subr.mxu0 0.0
      %1026 = vmatpush1.msra.mxu0 0.0
      %1027 = vmatprep.subr.mxu0 0.0
      %1028 = vmatpush1.msra.mxu0 0.0
      %1029 = vmatprep.subr.mxu0 0.0
      %1030 = vmatpush1.msra.mxu0 0.0
      %1031 = vmatprep.subr.mxu0 0.0
      %1032 = vmatpush1.msra.mxu0 0.0
      %1033 = vmatprep.mubr.f32.mxu0 0.0
      %1034 = vmatmul.mubr.f32.gmra.mrb[0].mxu0 %v882
      %v1035 = vpop.f32.mrb[0].mxu0
      %v1036 = vadd.f32 %v967, %v1035
      %v1037 = vpop.f32.mrb[0].mxu0
      %1038 = vmatprep.mubr.f32.mxu0 0.0
      %1039 = vmatmul.mubr.f32.gmra.mrb[0].mxu0 %v883
      %v1040 = vpop.f32.mrb[0].mxu0
      %v1041 = vadd.f32 %v967, %v1040
      %v1042 = vpop.f32.mrb[0].mxu0
      %1043 = vmatprep.mubr.f32.mxu0 0.0
      %1044 = vmatmul.mubr.f32.gmra.mrb[0].mxu0 %v884
      %v1045 = vpop.f32.mrb[0].mxu0
      %v1046 = vadd.f32 %v967, %v1045
      %v1047 = vpop.f32.mrb[0].mxu0
      %1048 = vmatprep.mubr.f32.mxu0 0.0
      %1049 = vmatmul.mubr.f32.gmra.mrb[0].mxu0 %v885
      %v1050 = vpop.f32.mrb[0].mxu0
      %v1051 = vadd.f32 %v967, %v1050
      %v1052 = vpop.f32.mrb[0].mxu0
      %1053 = vmatprep.mubr.f32.mxu0 0.0
      %1054 = vmatmul.mubr.f32.gmra.mrb[0].mxu0 %v886
      %v1055 = vpop.f32.mrb[0].mxu0
      %v1056 = vadd.f32 %v967, %v1055
      %v1057 = vpop.f32.mrb[0].mxu0
      %1058 = vmatprep.mubr.f32.mxu0 0.0
      %1059 = vmatmul.mubr.f32.gmra.mrb[0].mxu0 %v887
      %v1060 = vpop.f32.mrb[0].mxu0
      %v1061 = vadd.f32 %v967, %v1060
      %v1062 = vpop.f32.mrb[0].mxu0
      %1063 = vmatprep.mubr.f32.mxu0 0.0
      %1064 = vmatmul.mubr.f32.gmra.mrb[0].mxu0 %v888
      %v1065 = vpop.f32.mrb[0].mxu0
      %v1066 = vadd.f32 %v967, %v1065
      %v1067 = vpop.f32.mrb[0].mxu0
      %1068 = vmatprep.mubr.f32.mxu0 0.0
      %1069 = vmatmul.mubr.f32.gmra.mrb[0].mxu0 %v889
      %v1070 = vpop.f32.mrb[0].mxu0
      %v1071 = vadd.f32 %v967, %v1070
      %v1072 = vpop.f32.mrb[0].mxu0
      %1073 = vmatprep.mubr.f32.mxu0 0.0
      %1074 = vmatmul.mubr.f32.gmra.mrb[0].mxu0 %v890
      %v1075 = vpop.f32.mrb[0].mxu0
      %v1076 = vadd.f32 %v967, %v1075
      %v1077 = vpop.f32.mrb[0].mxu0
      %1078 = vmatprep.mubr.f32.mxu0 0.0
      %1079 = vmatmul.mubr.f32.gmra.mrb[0].mxu0 %v891
      %v1080 = vpop.f32.mrb[0].mxu0
      %v1081 = vadd.f32 %v967, %v1080
      %v1082 = vpop.f32.mrb[0].mxu0
      %1083 = vmatprep.mubr.f32.mxu0 0.0
      %1084 = vmatmul.mubr.f32.gmra.mrb[0].mxu0 %v892
      %v1085 = vpop.f32.mrb[0].mxu0
      %v1086 = vadd.f32 %v967, %v1085
      %v1087 = vpop.f32.mrb[0].mxu0
      %1088 = vmatprep.mubr.f32.mxu0 0.0
      %1089 = vmatmul.mubr.f32.gmra.mrb[0].mxu0 %v893
      %v1090 = vpop.f32.mrb[0].mxu0
      %v1091 = vadd.f32 %v967, %v1090
      %v1092 = vpop.f32.mrb[0].mxu0
      %1093 = vmatprep.mubr.f32.mxu0 0.0
      %1094 = vmatmul.mubr.f32.gmra.mrb[0].mxu0 %v894
      %v1095 = vpop.f32.mrb[0].mxu0
      %v1096 = vadd.f32 %v967, %v1095
      %v1097 = vpop.f32.mrb[0].mxu0
      %1098 = vmatprep.mubr.f32.mxu0 0.0
      %1099 = vmatmul.mubr.f32.gmra.mrb[0].mxu0 %v895
      %v1100 = vpop.f32.mrb[0].mxu0
      %v1101 = vadd.f32 %v967, %v1100
      %v1102 = vpop.f32.mrb[0].mxu0
      %1103 = vmatprep.mubr.f32.mxu0 0.0
      %1104 = vmatmul.mubr.f32.gmra.mrb[0].mxu0 %v896
      %v1105 = vpop.f32.mrb[0].mxu0
      %v1106 = vadd.f32 %v967, %v1105
      %v1107 = vpop.f32.mrb[0].mxu0
      %1108 = vmatprep.mubr.f32.mxu0 0.0
      %1109 = vmatmul.mubr.f32.gmra.mrb[0].mxu0 %v897
      %v1110 = vpop.f32.mrb[0].mxu0
      %v1111 = vadd.f32 %v967, %v1110
      %v1112 = vpop.f32.mrb[0].mxu0
      %1113 = vmatprep.mubr.f32.mxu0 0.0
      %1114 = vmatmul.mubr.f32.gmra.mrb[0].mxu0 %v898
      %v1115 = vpop.f32.mrb[0].mxu0
      %v1116 = vadd.f32 %v967, %v1115
      %v1117 = vpop.f32.mrb[0].mxu0
      %1118 = vmatprep.mubr.f32.mxu0 0.0
      %1119 = vmatmul.mubr.f32.gmra.mrb[0].mxu0 %v899
      %v1120 = vpop.f32.mrb[0].mxu0
      %v1121 = vadd.f32 %v967, %v1120
      %v1122 = vpop.f32.mrb[0].mxu0
      %1123 = vmatprep.mubr.f32.mxu0 0.0
      %1124 = vmatmul.mubr.f32.gmra.mrb[0].mxu0 %v900
      %v1125 = vpop.f32.mrb[0].mxu0
      %v1126 = vadd.f32 %v967, %v1125
      %v1127 = vpop.f32.mrb[0].mxu0
      %1128 = vmatprep.mubr.f32.mxu0 0.0
      %1129 = vmatmul.mubr.f32.gmra.mrb[0].mxu0 %v901
      %v1130 = vpop.f32.mrb[0].mxu0
      %v1131 = vadd.f32 %v967, %v1130
      %v1132 = vpop.f32.mrb[0].mxu0
      %1133 = vmatprep.mubr.f32.mxu0 0.0
      %1134 = vmatmul.mubr.f32.gmra.mrb[0].mxu0 %v902
      %v1135 = vpop.f32.mrb[0].mxu0
      %v1136 = vadd.f32 %v967, %v1135
      %v1137 = vpop.f32.mrb[0].mxu0
      %1138 = vmatprep.mubr.f32.mxu0 0.0
      %1139 = vmatmul.mubr.f32.gmra.mrb[0].mxu0 %v903
      %v1140 = vpop.f32.mrb[0].mxu0
      %v1141 = vadd.f32 %v967, %v1140
      %v1142 = vpop.f32.mrb[0].mxu0
      %1143 = vmatprep.mubr.f32.mxu0 0.0
      %1144 = vmatmul.mubr.f32.gmra.mrb[0].mxu0 %v904
      %v1145 = vpop.f32.mrb[0].mxu0
      %v1146 = vadd.f32 %v967, %v1145
      %v1147 = vpop.f32.mrb[0].mxu0
      %1148 = vmatprep.mubr.f32.mxu0 0.0
      %1149 = vmatmul.mubr.f32.gmra.mrb[0].mxu0 %v905
      %v1150 = vpop.f32.mrb[0].mxu0
      %v1151 = vadd.f32 %v967, %v1150
      %v1152 = vpop.f32.mrb[0].mxu0
      %1153 = vmatprep.mubr.f32.mxu0 0.0
      %1154 = vmatmul.mubr.f32.gmra.mrb[0].mxu0 %v906
      %v1155 = vpop.f32.mrb[0].mxu0
      %v1156 = vadd.f32 %v967, %v1155
      %v1157 = vpop.f32.mrb[0].mxu0
      %1158 = vmatprep.mubr.f32.mxu0 0.0
      %1159 = vmatmul.mubr.f32.gmra.mrb[0].mxu0 %v907
      %v1160 = vpop.f32.mrb[0].mxu0
      %v1161 = vadd.f32 %v967, %v1160
      %v1162 = vpop.f32.mrb[0].mxu0
      %1163 = vmatprep.mubr.f32.mxu0 0.0
      %1164 = vmatmul.mubr.f32.gmra.mrb[0].mxu0 %v908
      %v1165 = vpop.f32.mrb[0].mxu0
      %v1166 = vadd.f32 %v967, %v1165
      %v1167 = vpop.f32.mrb[0].mxu0
      %1168 = vmatprep.mubr.f32.mxu0 0.0
      %1169 = vmatmul.mubr.f32.gmra.mrb[0].mxu0 %v909
      %v1170 = vpop.f32.mrb[0].mxu0
      %v1171 = vadd.f32 %v967, %v1170
      %v1172 = vpop.f32.mrb[0].mxu0
      %1173 = vmatprep.mubr.f32.mxu0 0.0
      %1174 = vmatmul.mubr.f32.gmra.mrb[0].mxu0 %v910
      %v1175 = vpop.f32.mrb[0].mxu0
      %v1176 = vadd.f32 %v967, %v1175
      %v1177 = vpop.f32.mrb[0].mxu0
      %1178 = vmatprep.mubr.f32.mxu0 0.0
      %1179 = vmatmul.mubr.f32.gmra.mrb[0].mxu0 %v911
      %v1180 = vpop.f32.mrb[0].mxu0
      %v1181 = vadd.f32 %v967, %v1180
      %v1182 = vpop.f32.mrb[0].mxu0
      %1183 = vmatprep.mubr.f32.mxu0 0.0
      %1184 = vmatmul.mubr.f32.gmra.mrb[0].mxu0 %v912
      %v1185 = vpop.f32.mrb[0].mxu0
      %v1186 = vadd.f32 %v967, %v1185
      %v1187 = vpop.f32.mrb[0].mxu0
      %1188 = vmatprep.mubr.f32.mxu0 0.0
      %1189 = vmatmul.mubr.f32.gmra.mrb[0].mxu0 %v913
      %v1190 = vpop.f32.mrb[0].mxu0
      %v1191 = vadd.f32 %v967, %v1190
      %v1192 = vpop.f32.mrb[0].mxu0
      %1193 = vmatprep.mubr.f32.mxu0 0.0
      %1194 = vmatmul.mubr.f32.gmra.mrb[0].mxu0 %v914
      %v1195 = vpop.f32.mrb[0].mxu0
      %v1196 = vadd.f32 %v967, %v1195
      %v1197 = vpop.f32.mrb[0].mxu0
      %1198 = vmatprep.mubr.f32.mxu0 0.0
      %1199 = vmatmul.mubr.f32.gmra.mrb[0].mxu0 %v915
      %v1200 = vpop.f32.mrb[0].mxu0
      %v1201 = vadd.f32 %v967, %v1200
      %v1202 = vpop.f32.mrb[0].mxu0
      %1203 = vmatprep.mubr.f32.mxu0 0.0
      %1204 = vmatmul.mubr.f32.gmra.mrb[0].mxu0 %v916
      %v1205 = vpop.f32.mrb[0].mxu0
      %v1206 = vadd.f32 %v967, %v1205
      %v1207 = vpop.f32.mrb[0].mxu0
      %1208 = vmatprep.mubr.f32.mxu0 0.0
      %1209 = vmatmul.mubr.f32.gmra.mrb[0].mxu0 %v917
      %v1210 = vpop.f32.mrb[0].mxu0
      %v1211 = vadd.f32 %v967, %v1210
      %v1212 = vpop.f32.mrb[0].mxu0
      %1213 = vmatprep.mubr.f32.mxu0 0.0
      %1214 = vmatmul.mubr.f32.gmra.mrb[0].mxu0 %v918
      %v1215 = vpop.f32.mrb[0].mxu0
      %v1216 = vadd.f32 %v967, %v1215
      %v1217 = vpop.f32.mrb[0].mxu0
      %1218 = vmatprep.mubr.f32.mxu0 0.0
      %1219 = vmatmul.mubr.f32.gmra.mrb[0].mxu0 %v919
      %v1220 = vpop.f32.mrb[0].mxu0
      %v1221 = vadd.f32 %v967, %v1220
      %v1222 = vpop.f32.mrb[0].mxu0
      %1223 = vmatprep.mubr.f32.mxu0 0.0
      %1224 = vmatmul.mubr.f32.gmra.mrb[0].mxu0 %v920
      %v1225 = vpop.f32.mrb[0].mxu0
      %v1226 = vadd.f32 %v967, %v1225
      %v1227 = vpop.f32.mrb[0].mxu0
      %1228 = vmatprep.mubr.f32.mxu0 0.0
      %1229 = vmatmul.mubr.f32.gmra.mrb[0].mxu0 %v921
      %v1230 = vpop.f32.mrb[0].mxu0
      %v1231 = vadd.f32 %v967, %v1230
      %v1232 = vpop.f32.mrb[0].mxu0
      %1233 = vmatprep.mubr.f32.mxu0 0.0
      %1234 = vmatmul.mubr.f32.gmra.mrb[0].mxu0 %v922
      %v1235 = vpop.f32.mrb[0].mxu0
      %v1236 = vadd.f32 %v967, %v1235
      %v1237 = vpop.f32.mrb[0].mxu0
      %1238 = vmatprep.mubr.f32.mxu0 0.0
      %1239 = vmatmul.mubr.f32.gmra.mrb[0].mxu0 %v923
      %v1240 = vpop.f32.mrb[0].mxu0
      %v1241 = vadd.f32 %v967, %v1240
      %v1242 = vpop.f32.mrb[0].mxu0
      %1243 = vmatprep.mubr.f32.mxu0 0.0
      %1244 = vmatmul.mubr.f32.gmra.mrb[0].mxu0 %v924
      %v1245 = vpop.f32.mrb[0].mxu0
      %v1246 = vadd.f32 %v967, %v1245
      %v1247 = vpop.f32.mrb[0].mxu0
      %1248 = vmatprep.mubr.f32.mxu0 0.0
      %1249 = vmatmul.mubr.f32.gmra.mrb[0].mxu0 %v925
      %v1250 = vpop.f32.mrb[0].mxu0
      %v1251 = vadd.f32 %v967, %v1250
      %v1252 = vpop.f32.mrb[0].mxu0
      %1253 = vmatprep.mubr.f32.mxu0 0.0
      %1254 = vmatmul.mubr.f32.gmra.mrb[0].mxu0 %v926
      %v1255 = vpop.f32.mrb[0].mxu0
      %v1256 = vadd.f32 %v967, %v1255
      %v1257 = vpop.f32.mrb[0].mxu0
      %1258 = vmatprep.mubr.f32.mxu0 0.0
      %1259 = vmatmul.mubr.f32.gmra.mrb[0].mxu0 %v927
      %v1260 = vpop.f32.mrb[0].mxu0
      %v1261 = vadd.f32 %v967, %v1260
      %v1262 = vpop.f32.mrb[0].mxu0
      %1263 = vmatprep.mubr.f32.mxu0 0.0
      %1264 = vmatmul.mubr.f32.gmra.mrb[0].mxu0 %v928
      %v1265 = vpop.f32.mrb[0].mxu0
      %v1266 = vadd.f32 %v967, %v1265
      %v1267 = vpop.f32.mrb[0].mxu0
      %1268 = vmatprep.mubr.f32.mxu0 0.0
      %1269 = vmatmul.mubr.f32.gmra.mrb[0].mxu0 %v929
      %v1270 = vpop.f32.mrb[0].mxu0
      %v1271 = vadd.f32 %v967, %v1270
      %v1272 = vpop.f32.mrb[0].mxu0
      %1273 = vmatprep.mubr.f32.mxu0 0.0
      %1274 = vmatmul.mubr.f32.gmra.mrb[0].mxu0 %v930
      %v1275 = vpop.f32.mrb[0].mxu0
      %v1276 = vadd.f32 %v967, %v1275
      %v1277 = vpop.f32.mrb[0].mxu0
      %1278 = vmatprep.mubr.f32.mxu0 0.0
      %1279 = vmatmul.mubr.f32.gmra.mrb[0].mxu0 %v931
      %v1280 = vpop.f32.mrb[0].mxu0
      %v1281 = vadd.f32 %v967, %v1280
      %v1282 = vpop.f32.mrb[0].mxu0
      %1283 = vmatprep.mubr.f32.mxu0 0.0
      %1284 = vmatmul.mubr.f32.gmra.mrb[0].mxu0 %v932
      %v1285 = vpop.f32.mrb[0].mxu0
      %v1286 = vadd.f32 %v967, %v1285
      %v1287 = vpop.f32.mrb[0].mxu0
      %1288 = vmatprep.mubr.f32.mxu0 0.0
      %1289 = vmatmul.mubr.f32.gmra.mrb[0].mxu0 %v933
      %v1290 = vpop.f32.mrb[0].mxu0
      %v1291 = vadd.f32 %v967, %v1290
      %v1292 = vpop.f32.mrb[0].mxu0
      %1293 = vmatprep.mubr.f32.mxu0 0.0
      %1294 = vmatmul.mubr.f32.gmra.mrb[0].mxu0 %v934
      %v1295 = vpop.f32.mrb[0].mxu0
      %v1296 = vadd.f32 %v967, %v1295
      %v1297 = vpop.f32.mrb[0].mxu0
      %1298 = vmatprep.mubr.f32.mxu0 0.0
      %1299 = vmatmul.mubr.f32.gmra.mrb[0].mxu0 %v935
      %v1300 = vpop.f32.mrb[0].mxu0
      %v1301 = vadd.f32 %v967, %v1300
      %v1302 = vpop.f32.mrb[0].mxu0
      %1303 = vmatprep.mubr.f32.mxu0 0.0
      %1304 = vmatmul.mubr.f32.gmra.mrb[0].mxu0 %v936
      %v1305 = vpop.f32.mrb[0].mxu0
      %v1306 = vadd.f32 %v967, %v1305
      %v1307 = vpop.f32.mrb[0].mxu0
      %1308 = vmatprep.mubr.f32.mxu0 0.0
      %1309 = vmatmul.mubr.f32.gmra.mrb[0].mxu0 %v937
      %v1310 = vpop.f32.mrb[0].mxu0
      %v1311 = vadd.f32 %v967, %v1310
      %v1312 = vpop.f32.mrb[0].mxu0
      %1313 = vmatprep.mubr.f32.mxu0 0.0
      %1314 = vmatmul.mubr.f32.gmra.mrb[0].mxu0 %v938
      %v1315 = vpop.f32.mrb[0].mxu0
      %v1316 = vadd.f32 %v967, %v1315
      %v1317 = vpop.f32.mrb[0].mxu0
      %1318 = vmatprep.mubr.f32.mxu0 0.0
      %1319 = vmatmul.mubr.f32.gmra.mrb[0].mxu0 %v939
      %v1320 = vpop.f32.mrb[0].mxu0
      %v1321 = vadd.f32 %v967, %v1320
      %v1322 = vpop.f32.mrb[0].mxu0
      %1323 = vmatprep.mubr.f32.mxu0 0.0
      %1324 = vmatmul.mubr.f32.gmra.mrb[0].mxu0 %v940
      %v1325 = vpop.f32.mrb[0].mxu0
      %v1326 = vadd.f32 %v967, %v1325
      %v1327 = vpop.f32.mrb[0].mxu0
      %1328 = vmatprep.mubr.f32.mxu0 0.0
      %1329 = vmatmul.mubr.f32.gmra.mrb[0].mxu0 %v941
      %v1330 = vpop.f32.mrb[0].mxu0
      %v1331 = vadd.f32 %v967, %v1330
      %v1332 = vpop.f32.mrb[0].mxu0
      %1333 = vmatprep.mubr.f32.mxu0 0.0
      %1334 = vmatmul.mubr.f32.gmra.mrb[0].mxu0 %v942
      %v1335 = vpop.f32.mrb[0].mxu0
      %v1336 = vadd.f32 %v967, %v1335
      %v1337 = vpop.f32.mrb[0].mxu0
      %1338 = vmatprep.mubr.f32.mxu0 0.0
      %1339 = vmatmul.mubr.f32.gmra.mrb[0].mxu0 %v943
      %v1340 = vpop.f32.mrb[0].mxu0
      %v1341 = vadd.f32 %v967, %v1340
      %v1342 = vpop.f32.mrb[0].mxu0
      %1343 = vmatprep.mubr.f32.mxu0 0.0
      %1344 = vmatmul.mubr.f32.gmra.mrb[0].mxu0 %v944
      %v1345 = vpop.f32.mrb[0].mxu0
      %v1346 = vadd.f32 %v967, %v1345
      %v1347 = vpop.f32.mrb[0].mxu0
      %1348 = vmatprep.mubr.f32.mxu0 0.0
      %1349 = vmatmul.mubr.f32.gmra.mrb[0].mxu0 %v945
      %v1350 = vpop.f32.mrb[0].mxu0
      %v1351 = vadd.f32 %v967, %v1350
      %v1352 = vpop.f32.mrb[0].mxu0
      %1353 = vdwg.mxu0
      %1354 = vmax.xlane.f32.xlu0 %v1036
      %v1355 = vpop.xlane.xlu0 %1354
      %1356 = vmax.xlane.f32.xlu0 %v1041
      %v1357 = vpop.xlane.xlu0 %1356
      %1358 = vmax.xlane.f32.xlu0 %v1046
      %v1359 = vpop.xlane.xlu0 %1358
      %1360 = vmax.xlane.f32.xlu0 %v1051
      %v1361 = vpop.xlane.xlu0 %1360
      %1362 = vmax.xlane.f32.xlu0 %v1056
      %v1363 = vpop.xlane.xlu0 %1362
      %1364 = vmax.xlane.f32.xlu0 %v1061
      %v1365 = vpop.xlane.xlu0 %1364
      %1366 = vmax.xlane.f32.xlu0 %v1066
      %v1367 = vpop.xlane.xlu0 %1366
      %1368 = vmax.xlane.f32.xlu0 %v1071
      %v1369 = vpop.xlane.xlu0 %1368
      %1370 = vmax.xlane.f32.xlu0 %v1076
      %v1371 = vpop.xlane.xlu0 %1370
      %1372 = vmax.xlane.f32.xlu0 %v1081
      %v1373 = vpop.xlane.xlu0 %1372
      %1374 = vmax.xlane.f32.xlu0 %v1086
      %v1375 = vpop.xlane.xlu0 %1374
      %1376 = vmax.xlane.f32.xlu0 %v1091
      %v1377 = vpop.xlane.xlu0 %1376
      %1378 = vmax.xlane.f32.xlu0 %v1096
      %v1379 = vpop.xlane.xlu0 %1378
      %1380 = vmax.xlane.f32.xlu0 %v1101
      %v1381 = vpop.xlane.xlu0 %1380
      %1382 = vmax.xlane.f32.xlu0 %v1106
      %v1383 = vpop.xlane.xlu0 %1382
      %1384 = vmax.xlane.f32.xlu0 %v1111
      %v1385 = vpop.xlane.xlu0 %1384
      %1386 = vmax.xlane.f32.xlu0 %v1116
      %v1387 = vpop.xlane.xlu0 %1386
      %1388 = vmax.xlane.f32.xlu0 %v1121
      %v1389 = vpop.xlane.xlu0 %1388
      %1390 = vmax.xlane.f32.xlu0 %v1126
      %v1391 = vpop.xlane.xlu0 %1390
      %1392 = vmax.xlane.f32.xlu0 %v1131
      %v1393 = vpop.xlane.xlu0 %1392
      %1394 = vmax.xlane.f32.xlu0 %v1136
      %v1395 = vpop.xlane.xlu0 %1394
      %1396 = vmax.xlane.f32.xlu0 %v1141
      %v1397 = vpop.xlane.xlu0 %1396
      %1398 = vmax.xlane.f32.xlu0 %v1146
      %v1399 = vpop.xlane.xlu0 %1398
      %1400 = vmax.xlane.f32.xlu0 %v1151
      %v1401 = vpop.xlane.xlu0 %1400
      %1402 = vmax.xlane.f32.xlu0 %v1156
      %v1403 = vpop.xlane.xlu0 %1402
      %1404 = vmax.xlane.f32.xlu0 %v1161
      %v1405 = vpop.xlane.xlu0 %1404
      %1406 = vmax.xlane.f32.xlu0 %v1166
      %v1407 = vpop.xlane.xlu0 %1406
      %1408 = vmax.xlane.f32.xlu0 %v1171
      %v1409 = vpop.xlane.xlu0 %1408
      %1410 = vmax.xlane.f32.xlu0 %v1176
      %v1411 = vpop.xlane.xlu0 %1410
      %1412 = vmax.xlane.f32.xlu0 %v1181
      %v1413 = vpop.xlane.xlu0 %1412
      %1414 = vmax.xlane.f32.xlu0 %v1186
      %v1415 = vpop.xlane.xlu0 %1414
      %1416 = vmax.xlane.f32.xlu0 %v1191
      %v1417 = vpop.xlane.xlu0 %1416
      %1418 = vmax.xlane.f32.xlu0 %v1196
      %v1419 = vpop.xlane.xlu0 %1418
      %1420 = vmax.xlane.f32.xlu0 %v1201
      %v1421 = vpop.xlane.xlu0 %1420
      %1422 = vmax.xlane.f32.xlu0 %v1206
      %v1423 = vpop.xlane.xlu0 %1422
      %1424 = vmax.xlane.f32.xlu0 %v1211
      %v1425 = vpop.xlane.xlu0 %1424
      %1426 = vmax.xlane.f32.xlu0 %v1216
      %v1427 = vpop.xlane.xlu0 %1426
      %1428 = vmax.xlane.f32.xlu0 %v1221
      %v1429 = vpop.xlane.xlu0 %1428
      %1430 = vmax.xlane.f32.xlu0 %v1226
      %v1431 = vpop.xlane.xlu0 %1430
      %1432 = vmax.xlane.f32.xlu0 %v1231
      %v1433 = vpop.xlane.xlu0 %1432
      %1434 = vmax.xlane.f32.xlu0 %v1236
      %v1435 = vpop.xlane.xlu0 %1434
      %1436 = vmax.xlane.f32.xlu0 %v1241
      %v1437 = vpop.xlane.xlu0 %1436
      %1438 = vmax.xlane.f32.xlu0 %v1246
      %v1439 = vpop.xlane.xlu0 %1438
      %1440 = vmax.xlane.f32.xlu0 %v1251
      %v1441 = vpop.xlane.xlu0 %1440
      %1442 = vmax.xlane.f32.xlu0 %v1256
      %v1443 = vpop.xlane.xlu0 %1442
      %1444 = vmax.xlane.f32.xlu0 %v1261
      %v1445 = vpop.xlane.xlu0 %1444
      %1446 = vmax.xlane.f32.xlu0 %v1266
      %v1447 = vpop.xlane.xlu0 %1446
      %1448 = vmax.xlane.f32.xlu0 %v1271
      %v1449 = vpop.xlane.xlu0 %1448
      %1450 = vmax.xlane.f32.xlu0 %v1276
      %v1451 = vpop.xlane.xlu0 %1450
      %1452 = vmax.xlane.f32.xlu0 %v1281
      %v1453 = vpop.xlane.xlu0 %1452
      %1454 = vmax.xlane.f32.xlu0 %v1286
      %v1455 = vpop.xlane.xlu0 %1454
      %1456 = vmax.xlane.f32.xlu0 %v1291
      %v1457 = vpop.xlane.xlu0 %1456
      %1458 = vmax.xlane.f32.xlu0 %v1296
      %v1459 = vpop.xlane.xlu0 %1458
      %1460 = vmax.xlane.f32.xlu0 %v1301
      %v1461 = vpop.xlane.xlu0 %1460
      %1462 = vmax.xlane.f32.xlu0 %v1306
      %v1463 = vpop.xlane.xlu0 %1462
      %1464 = vmax.xlane.f32.xlu0 %v1311
      %v1465 = vpop.xlane.xlu0 %1464
      %1466 = vmax.xlane.f32.xlu0 %v1316
      %v1467 = vpop.xlane.xlu0 %1466
      %1468 = vmax.xlane.f32.xlu0 %v1321
      %v1469 = vpop.xlane.xlu0 %1468
      %1470 = vmax.xlane.f32.xlu0 %v1326
      %v1471 = vpop.xlane.xlu0 %1470
      %1472 = vmax.xlane.f32.xlu0 %v1331
      %v1473 = vpop.xlane.xlu0 %1472
      %1474 = vmax.xlane.f32.xlu0 %v1336
      %v1475 = vpop.xlane.xlu0 %1474
      %1476 = vmax.xlane.f32.xlu0 %v1341
      %v1477 = vpop.xlane.xlu0 %1476
      %1478 = vmax.xlane.f32.xlu0 %v1346
      %v1479 = vpop.xlane.xlu0 %1478
      %1480 = vmax.xlane.f32.xlu0 %v1351
      %v1481 = vpop.xlane.xlu0 %1480
      %v1482 = vsub.f32 %v1036, %v1355
      %v1483 = vsub.f32 %v1041, %v1357
      %v1484 = vsub.f32 %v1046, %v1359
      %v1485 = vsub.f32 %v1051, %v1361
      %v1486 = vsub.f32 %v1056, %v1363
      %v1487 = vsub.f32 %v1061, %v1365
      %v1488 = vsub.f32 %v1066, %v1367
      %v1489 = vsub.f32 %v1071, %v1369
      %v1490 = vsub.f32 %v1076, %v1371
      %v1491 = vsub.f32 %v1081, %v1373
      %v1492 = vsub.f32 %v1086, %v1375
      %v1493 = vsub.f32 %v1091, %v1377
      %v1494 = vsub.f32 %v1096, %v1379
      %v1495 = vsub.f32 %v1101, %v1381
      %v1496 = vsub.f32 %v1106, %v1383
      %v1497 = vsub.f32 %v1111, %v1385
      %v1498 = vsub.f32 %v1116, %v1387
      %v1499 = vsub.f32 %v1121, %v1389
      %v1500 = vsub.f32 %v1126, %v1391
      %v1501 = vsub.f32 %v1131, %v1393
      %v1502 = vsub.f32 %v1136, %v1395
      %v1503 = vsub.f32 %v1141, %v1397
      %v1504 = vsub.f32 %v1146, %v1399
      %v1505 = vsub.f32 %v1151, %v1401
      %v1506 = vsub.f32 %v1156, %v1403
      %v1507 = vsub.f32 %v1161, %v1405
      %v1508 = vsub.f32 %v1166, %v1407
      %v1509 = vsub.f32 %v1171, %v1409
      %v1510 = vsub.f32 %v1176, %v1411
      %v1511 = vsub.f32 %v1181, %v1413
      %v1512 = vsub.f32 %v1186, %v1415
      %v1513 = vsub.f32 %v1191, %v1417
      %v1514 = vsub.f32 %v1196, %v1419
      %v1515 = vsub.f32 %v1201, %v1421
      %v1516 = vsub.f32 %v1206, %v1423
      %v1517 = vsub.f32 %v1211, %v1425
      %v1518 = vsub.f32 %v1216, %v1427
      %v1519 = vsub.f32 %v1221, %v1429
      %v1520 = vsub.f32 %v1226, %v1431
      %v1521 = vsub.f32 %v1231, %v1433
      %v1522 = vsub.f32 %v1236, %v1435
      %v1523 = vsub.f32 %v1241, %v1437
      %v1524 = vsub.f32 %v1246, %v1439
      %v1525 = vsub.f32 %v1251, %v1441
      %v1526 = vsub.f32 %v1256, %v1443
      %v1527 = vsub.f32 %v1261, %v1445
      %v1528 = vsub.f32 %v1266, %v1447
      %v1529 = vsub.f32 %v1271, %v1449
      %v1530 = vsub.f32 %v1276, %v1451
      %v1531 = vsub.f32 %v1281, %v1453
      %v1532 = vsub.f32 %v1286, %v1455
      %v1533 = vsub.f32 %v1291, %v1457
      %v1534 = vsub.f32 %v1296, %v1459
      %v1535 = vsub.f32 %v1301, %v1461
      %v1536 = vsub.f32 %v1306, %v1463
      %v1537 = vsub.f32 %v1311, %v1465
      %v1538 = vsub.f32 %v1316, %v1467
      %v1539 = vsub.f32 %v1321, %v1469
      %v1540 = vsub.f32 %v1326, %v1471
      %v1541 = vsub.f32 %v1331, %v1473
      %v1542 = vsub.f32 %v1336, %v1475
      %v1543 = vsub.f32 %v1341, %v1477
      %v1544 = vsub.f32 %v1346, %v1479
      %v1545 = vsub.f32 %v1351, %v1481
      %v1546 = vmul.f32 %v1482, 1.442695
      %v1547 = vpow.pop %v1546
      %v1548 = vmul.f32 %v1483, 1.442695
      %v1549 = vpow.pop %v1548
      %v1550 = vmul.f32 %v1484, 1.442695
      %v1551 = vpow.pop %v1550
      %v1552 = vmul.f32 %v1485, 1.442695
      %v1553 = vpow.pop %v1552
      %v1554 = vmul.f32 %v1486, 1.442695
      %v1555 = vpow.pop %v1554
      %v1556 = vmul.f32 %v1487, 1.442695
      %v1557 = vpow.pop %v1556
      %v1558 = vmul.f32 %v1488, 1.442695
      %v1559 = vpow.pop %v1558
      %v1560 = vmul.f32 %v1489, 1.442695
      %v1561 = vpow.pop %v1560
      %v1562 = vmul.f32 %v1490, 1.442695
      %v1563 = vpow.pop %v1562
      %v1564 = vmul.f32 %v1491, 1.442695
      %v1565 = vpow.pop %v1564
      %v1566 = vmul.f32 %v1492, 1.442695
      %v1567 = vpow.pop %v1566
      %v1568 = vmul.f32 %v1493, 1.442695
      %v1569 = vpow.pop %v1568
      %v1570 = vmul.f32 %v1494, 1.442695
      %v1571 = vpow.pop %v1570
      %v1572 = vmul.f32 %v1495, 1.442695
      %v1573 = vpow.pop %v1572
      %v1574 = vmul.f32 %v1496, 1.442695
      %v1575 = vpow.pop %v1574
      %v1576 = vmul.f32 %v1497, 1.442695
      %v1577 = vpow.pop %v1576
      %v1578 = vmul.f32 %v1498, 1.442695
      %v1579 = vpow.pop %v1578
      %v1580 = vmul.f32 %v1499, 1.442695
      %v1581 = vpow.pop %v1580
      %v1582 = vmul.f32 %v1500, 1.442695
      %v1583 = vpow.pop %v1582
      %v1584 = vmul.f32 %v1501, 1.442695
      %v1585 = vpow.pop %v1584
      %v1586 = vmul.f32 %v1502, 1.442695
      %v1587 = vpow.pop %v1586
      %v1588 = vmul.f32 %v1503, 1.442695
      %v1589 = vpow.pop %v1588
      %v1590 = vmul.f32 %v1504, 1.442695
      %v1591 = vpow.pop %v1590
      %v1592 = vmul.f32 %v1505, 1.442695
      %v1593 = vpow.pop %v1592
      %v1594 = vmul.f32 %v1506, 1.442695
      %v1595 = vpow.pop %v1594
      %v1596 = vmul.f32 %v1507, 1.442695
      %v1597 = vpow.pop %v1596
      %v1598 = vmul.f32 %v1508, 1.442695
      %v1599 = vpow.pop %v1598
      %v1600 = vmul.f32 %v1509, 1.442695
      %v1601 = vpow.pop %v1600
      %v1602 = vmul.f32 %v1510, 1.442695
      %v1603 = vpow.pop %v1602
      %v1604 = vmul.f32 %v1511, 1.442695
      %v1605 = vpow.pop %v1604
      %v1606 = vmul.f32 %v1512, 1.442695
      %v1607 = vpow.pop %v1606
      %v1608 = vmul.f32 %v1513, 1.442695
      %v1609 = vpow.pop %v1608
      %v1610 = vmul.f32 %v1514, 1.442695
      %v1611 = vpow.pop %v1610
      %v1612 = vmul.f32 %v1515, 1.442695
      %v1613 = vpow.pop %v1612
      %v1614 = vmul.f32 %v1516, 1.442695
      %v1615 = vpow.pop %v1614
      %v1616 = vmul.f32 %v1517, 1.442695
      %v1617 = vpow.pop %v1616
      %v1618 = vmul.f32 %v1518, 1.442695
      %v1619 = vpow.pop %v1618
      %v1620 = vmul.f32 %v1519, 1.442695
      %v1621 = vpow.pop %v1620
      %v1622 = vmul.f32 %v1520, 1.442695
      %v1623 = vpow.pop %v1622
      %v1624 = vmul.f32 %v1521, 1.442695
      %v1625 = vpow.pop %v1624
      %v1626 = vmul.f32 %v1522, 1.442695
      %v1627 = vpow.pop %v1626
      %v1628 = vmul.f32 %v1523, 1.442695
      %v1629 = vpow.pop %v1628
      %v1630 = vmul.f32 %v1524, 1.442695
      %v1631 = vpow.pop %v1630
      %v1632 = vmul.f32 %v1525, 1.442695
      %v1633 = vpow.pop %v1632
      %v1634 = vmul.f32 %v1526, 1.442695
      %v1635 = vpow.pop %v1634
      %v1636 = vmul.f32 %v1527, 1.442695
      %v1637 = vpow.pop %v1636
      %v1638 = vmul.f32 %v1528, 1.442695
      %v1639 = vpow.pop %v1638
      %v1640 = vmul.f32 %v1529, 1.442695
      %v1641 = vpow.pop %v1640
      %v1642 = vmul.f32 %v1530, 1.442695
      %v1643 = vpow.pop %v1642
      %v1644 = vmul.f32 %v1531, 1.442695
      %v1645 = vpow.pop %v1644
      %v1646 = vmul.f32 %v1532, 1.442695
      %v1647 = vpow.pop %v1646
      %v1648 = vmul.f32 %v1533, 1.442695
      %v1649 = vpow.pop %v1648
      %v1650 = vmul.f32 %v1534, 1.442695
      %v1651 = vpow.pop %v1650
      %v1652 = vmul.f32 %v1535, 1.442695
      %v1653 = vpow.pop %v1652
      %v1654 = vmul.f32 %v1536, 1.442695
      %v1655 = vpow.pop %v1654
      %v1656 = vmul.f32 %v1537, 1.442695
      %v1657 = vpow.pop %v1656
      %v1658 = vmul.f32 %v1538, 1.442695
      %v1659 = vpow.pop %v1658
      %v1660 = vmul.f32 %v1539, 1.442695
      %v1661 = vpow.pop %v1660
      %v1662 = vmul.f32 %v1540, 1.442695
      %v1663 = vpow.pop %v1662
      %v1664 = vmul.f32 %v1541, 1.442695
      %v1665 = vpow.pop %v1664
      %v1666 = vmul.f32 %v1542, 1.442695
      %v1667 = vpow.pop %v1666
      %v1668 = vmul.f32 %v1543, 1.442695
      %v1669 = vpow.pop %v1668
      %v1670 = vmul.f32 %v1544, 1.442695
      %v1671 = vpow.pop %v1670
      %v1672 = vmul.f32 %v1545, 1.442695
      %v1673 = vpow.pop %v1672
      %1674 = vadd.xlane.f32.xlu0 %v1547
      %v1675 = vpop.xlane.xlu0 %1674
      %1676 = vadd.xlane.f32.xlu0 %v1549
      %v1677 = vpop.xlane.xlu0 %1676
      %1678 = vadd.xlane.f32.xlu0 %v1551
      %v1679 = vpop.xlane.xlu0 %1678
      %1680 = vadd.xlane.f32.xlu0 %v1553
      %v1681 = vpop.xlane.xlu0 %1680
      %1682 = vadd.xlane.f32.xlu0 %v1555
      %v1683 = vpop.xlane.xlu0 %1682
      %1684 = vadd.xlane.f32.xlu0 %v1557
      %v1685 = vpop.xlane.xlu0 %1684
      %1686 = vadd.xlane.f32.xlu0 %v1559
      %v1687 = vpop.xlane.xlu0 %1686
      %1688 = vadd.xlane.f32.xlu0 %v1561
      %v1689 = vpop.xlane.xlu0 %1688
      %1690 = vadd.xlane.f32.xlu0 %v1563
      %v1691 = vpop.xlane.xlu0 %1690
      %1692 = vadd.xlane.f32.xlu0 %v1565
      %v1693 = vpop.xlane.xlu0 %1692
      %1694 = vadd.xlane.f32.xlu0 %v1567
      %v1695 = vpop.xlane.xlu0 %1694
      %1696 = vadd.xlane.f32.xlu0 %v1569
      %v1697 = vpop.xlane.xlu0 %1696
      %1698 = vadd.xlane.f32.xlu0 %v1571
      %v1699 = vpop.xlane.xlu0 %1698
      %1700 = vadd.xlane.f32.xlu0 %v1573
      %v1701 = vpop.xlane.xlu0 %1700
      %1702 = vadd.xlane.f32.xlu0 %v1575
      %v1703 = vpop.xlane.xlu0 %1702
      %1704 = vadd.xlane.f32.xlu0 %v1577
      %v1705 = vpop.xlane.xlu0 %1704
      %1706 = vadd.xlane.f32.xlu0 %v1579
      %v1707 = vpop.xlane.xlu0 %1706
      %1708 = vadd.xlane.f32.xlu0 %v1581
      %v1709 = vpop.xlane.xlu0 %1708
      %1710 = vadd.xlane.f32.xlu0 %v1583
      %v1711 = vpop.xlane.xlu0 %1710
      %1712 = vadd.xlane.f32.xlu0 %v1585
      %v1713 = vpop.xlane.xlu0 %1712
      %1714 = vadd.xlane.f32.xlu0 %v1587
      %v1715 = vpop.xlane.xlu0 %1714
      %1716 = vadd.xlane.f32.xlu0 %v1589
      %v1717 = vpop.xlane.xlu0 %1716
      %1718 = vadd.xlane.f32.xlu0 %v1591
      %v1719 = vpop.xlane.xlu0 %1718
      %1720 = vadd.xlane.f32.xlu0 %v1593
      %v1721 = vpop.xlane.xlu0 %1720
      %1722 = vadd.xlane.f32.xlu0 %v1595
      %v1723 = vpop.xlane.xlu0 %1722
      %1724 = vadd.xlane.f32.xlu0 %v1597
      %v1725 = vpop.xlane.xlu0 %1724
      %1726 = vadd.xlane.f32.xlu0 %v1599
      %v1727 = vpop.xlane.xlu0 %1726
      %1728 = vadd.xlane.f32.xlu0 %v1601
      %v1729 = vpop.xlane.xlu0 %1728
      %1730 = vadd.xlane.f32.xlu0 %v1603
      %v1731 = vpop.xlane.xlu0 %1730
      %1732 = vadd.xlane.f32.xlu0 %v1605
      %v1733 = vpop.xlane.xlu0 %1732
      %1734 = vadd.xlane.f32.xlu0 %v1607
      %v1735 = vpop.xlane.xlu0 %1734
      %1736 = vadd.xlane.f32.xlu0 %v1609
      %v1737 = vpop.xlane.xlu0 %1736
      %1738 = vadd.xlane.f32.xlu0 %v1611
      %v1739 = vpop.xlane.xlu0 %1738
      %1740 = vadd.xlane.f32.xlu0 %v1613
      %v1741 = vpop.xlane.xlu0 %1740
      %1742 = vadd.xlane.f32.xlu0 %v1615
      %v1743 = vpop.xlane.xlu0 %1742
      %1744 = vadd.xlane.f32.xlu0 %v1617
      %v1745 = vpop.xlane.xlu0 %1744
      %1746 = vadd.xlane.f32.xlu0 %v1619
      %v1747 = vpop.xlane.xlu0 %1746
      %1748 = vadd.xlane.f32.xlu0 %v1621
      %v1749 = vpop.xlane.xlu0 %1748
      %1750 = vadd.xlane.f32.xlu0 %v1623
      %v1751 = vpop.xlane.xlu0 %1750
      %1752 = vadd.xlane.f32.xlu0 %v1625
      %v1753 = vpop.xlane.xlu0 %1752
      %1754 = vadd.xlane.f32.xlu0 %v1627
      %v1755 = vpop.xlane.xlu0 %1754
      %1756 = vadd.xlane.f32.xlu0 %v1629
      %v1757 = vpop.xlane.xlu0 %1756
      %1758 = vadd.xlane.f32.xlu0 %v1631
      %v1759 = vpop.xlane.xlu0 %1758
      %1760 = vadd.xlane.f32.xlu0 %v1633
      %v1761 = vpop.xlane.xlu0 %1760
      %1762 = vadd.xlane.f32.xlu0 %v1635
      %v1763 = vpop.xlane.xlu0 %1762
      %1764 = vadd.xlane.f32.xlu0 %v1637
      %v1765 = vpop.xlane.xlu0 %1764
      %1766 = vadd.xlane.f32.xlu0 %v1639
      %v1767 = vpop.xlane.xlu0 %1766
      %1768 = vadd.xlane.f32.xlu0 %v1641
      %v1769 = vpop.xlane.xlu0 %1768
      %1770 = vadd.xlane.f32.xlu0 %v1643
      %v1771 = vpop.xlane.xlu0 %1770
      %1772 = vadd.xlane.f32.xlu0 %v1645
      %v1773 = vpop.xlane.xlu0 %1772
      %1774 = vadd.xlane.f32.xlu0 %v1647
      %v1775 = vpop.xlane.xlu0 %1774
      %1776 = vadd.xlane.f32.xlu0 %v1649
      %v1777 = vpop.xlane.xlu0 %1776
      %1778 = vadd.xlane.f32.xlu0 %v1651
      %v1779 = vpop.xlane.xlu0 %1778
      %1780 = vadd.xlane.f32.xlu0 %v1653
      %v1781 = vpop.xlane.xlu0 %1780
      %1782 = vadd.xlane.f32.xlu0 %v1655
      %v1783 = vpop.xlane.xlu0 %1782
      %1784 = vadd.xlane.f32.xlu0 %v1657
      %v1785 = vpop.xlane.xlu0 %1784
      %1786 = vadd.xlane.f32.xlu0 %v1659
      %v1787 = vpop.xlane.xlu0 %1786
      %1788 = vadd.xlane.f32.xlu0 %v1661
      %v1789 = vpop.xlane.xlu0 %1788
      %1790 = vadd.xlane.f32.xlu0 %v1663
      %v1791 = vpop.xlane.xlu0 %1790
      %1792 = vadd.xlane.f32.xlu0 %v1665
      %v1793 = vpop.xlane.xlu0 %1792
      %1794 = vadd.xlane.f32.xlu0 %v1667
      %v1795 = vpop.xlane.xlu0 %1794
      %1796 = vadd.xlane.f32.xlu0 %v1669
      %v1797 = vpop.xlane.xlu0 %1796
      %1798 = vadd.xlane.f32.xlu0 %v1671
      %v1799 = vpop.xlane.xlu0 %1798
      %1800 = vadd.xlane.f32.xlu0 %v1673
      %v1801 = vpop.xlane.xlu0 %1800
      %v1802 = vrcp.pop %v1675
      %v1803 = vmul.f32 %v1547, %v1802
      %v1804 = vrcp.pop %v1677
      %v1805 = vmul.f32 %v1549, %v1804
      %v1806 = vrcp.pop %v1679
      %v1807 = vmul.f32 %v1551, %v1806
      %v1808 = vrcp.pop %v1681
      %v1809 = vmul.f32 %v1553, %v1808
      %v1810 = vrcp.pop %v1683
      %v1811 = vmul.f32 %v1555, %v1810
      %v1812 = vrcp.pop %v1685
      %v1813 = vmul.f32 %v1557, %v1812
      %v1814 = vrcp.pop %v1687
      %v1815 = vmul.f32 %v1559, %v1814
      %v1816 = vrcp.pop %v1689
      %v1817 = vmul.f32 %v1561, %v1816
      %v1818 = vrcp.pop %v1691
      %v1819 = vmul.f32 %v1563, %v1818
      %v1820 = vrcp.pop %v1693
      %v1821 = vmul.f32 %v1565, %v1820
      %v1822 = vrcp.pop %v1695
      %v1823 = vmul.f32 %v1567, %v1822
      %v1824 = vrcp.pop %v1697
      %v1825 = vmul.f32 %v1569, %v1824
      %v1826 = vrcp.pop %v1699
      %v1827 = vmul.f32 %v1571, %v1826
      %v1828 = vrcp.pop %v1701
      %v1829 = vmul.f32 %v1573, %v1828
      %v1830 = vrcp.pop %v1703
      %v1831 = vmul.f32 %v1575, %v1830
      %v1832 = vrcp.pop %v1705
      %v1833 = vmul.f32 %v1577, %v1832
      %v1834 = vrcp.pop %v1707
      %v1835 = vmul.f32 %v1579, %v1834
      %v1836 = vrcp.pop %v1709
      %v1837 = vmul.f32 %v1581, %v1836
      %v1838 = vrcp.pop %v1711
      %v1839 = vmul.f32 %v1583, %v1838
      %v1840 = vrcp.pop %v1713
      %v1841 = vmul.f32 %v1585, %v1840
      %v1842 = vrcp.pop %v1715
      %v1843 = vmul.f32 %v1587, %v1842
      %v1844 = vrcp.pop %v1717
      %v1845 = vmul.f32 %v1589, %v1844
      %v1846 = vrcp.pop %v1719
      %v1847 = vmul.f32 %v1591, %v1846
      %v1848 = vrcp.pop %v1721
      %v1849 = vmul.f32 %v1593, %v1848
      %v1850 = vrcp.pop %v1723
      %v1851 = vmul.f32 %v1595, %v1850
      %v1852 = vrcp.pop %v1725
      %v1853 = vmul.f32 %v1597, %v1852
      %v1854 = vrcp.pop %v1727
      %v1855 = vmul.f32 %v1599, %v1854
      %v1856 = vrcp.pop %v1729
      %v1857 = vmul.f32 %v1601, %v1856
      %v1858 = vrcp.pop %v1731
      %v1859 = vmul.f32 %v1603, %v1858
      %v1860 = vrcp.pop %v1733
      %v1861 = vmul.f32 %v1605, %v1860
      %v1862 = vrcp.pop %v1735
      %v1863 = vmul.f32 %v1607, %v1862
      %v1864 = vrcp.pop %v1737
      %v1865 = vmul.f32 %v1609, %v1864
      %v1866 = vrcp.pop %v1739
      %v1867 = vmul.f32 %v1611, %v1866
      %v1868 = vrcp.pop %v1741
      %v1869 = vmul.f32 %v1613, %v1868
      %v1870 = vrcp.pop %v1743
      %v1871 = vmul.f32 %v1615, %v1870
      %v1872 = vrcp.pop %v1745
      %v1873 = vmul.f32 %v1617, %v1872
      %v1874 = vrcp.pop %v1747
      %v1875 = vmul.f32 %v1619, %v1874
      %v1876 = vrcp.pop %v1749
      %v1877 = vmul.f32 %v1621, %v1876
      %v1878 = vrcp.pop %v1751
      %v1879 = vmul.f32 %v1623, %v1878
      %v1880 = vrcp.pop %v1753
      %v1881 = vmul.f32 %v1625, %v1880
      %v1882 = vrcp.pop %v1755
      %v1883 = vmul.f32 %v1627, %v1882
      %v1884 = vrcp.pop %v1757
      %v1885 = vmul.f32 %v1629, %v1884
      %v1886 = vrcp.pop %v1759
      %v1887 = vmul.f32 %v1631, %v1886
      %v1888 = vrcp.pop %v1761
      %v1889 = vmul.f32 %v1633, %v1888
      %v1890 = vrcp.pop %v1763
      %v1891 = vmul.f32 %v1635, %v1890
      %v1892 = vrcp.pop %v1765
      %v1893 = vmul.f32 %v1637, %v1892
      %v1894 = vrcp.pop %v1767
      %v1895 = vmul.f32 %v1639, %v1894
      %v1896 = vrcp.pop %v1769
      %v1897 = vmul.f32 %v1641, %v1896
      %v1898 = vrcp.pop %v1771
      %v1899 = vmul.f32 %v1643, %v1898
      %v1900 = vrcp.pop %v1773
      %v1901 = vmul.f32 %v1645, %v1900
      %v1902 = vrcp.pop %v1775
      %v1903 = vmul.f32 %v1647, %v1902
      %v1904 = vrcp.pop %v1777
      %v1905 = vmul.f32 %v1649, %v1904
      %v1906 = vrcp.pop %v1779
      %v1907 = vmul.f32 %v1651, %v1906
      %v1908 = vrcp.pop %v1781
      %v1909 = vmul.f32 %v1653, %v1908
      %v1910 = vrcp.pop %v1783
      %v1911 = vmul.f32 %v1655, %v1910
      %v1912 = vrcp.pop %v1785
      %v1913 = vmul.f32 %v1657, %v1912
      %v1914 = vrcp.pop %v1787
      %v1915 = vmul.f32 %v1659, %v1914
      %v1916 = vrcp.pop %v1789
      %v1917 = vmul.f32 %v1661, %v1916
      %v1918 = vrcp.pop %v1791
      %v1919 = vmul.f32 %v1663, %v1918
      %v1920 = vrcp.pop %v1793
      %v1921 = vmul.f32 %v1665, %v1920
      %v1922 = vrcp.pop %v1795
      %v1923 = vmul.f32 %v1667, %v1922
      %v1924 = vrcp.pop %v1797
      %v1925 = vmul.f32 %v1669, %v1924
      %v1926 = vrcp.pop %v1799
      %v1927 = vmul.f32 %v1671, %v1926
      %v1928 = vrcp.pop %v1801
      %v1929 = vmul.f32 %v1673, %v1928
      %1930 = vst [vmem:[%s226] sm:$0xff] %v1803
      %1931 = vst [vmem:[%s226 + $0x8] sm:$0xff] %v1805
      %1932 = vst [vmem:[%s226 + $0x10] sm:$0xff] %v1807
      %1933 = vst [vmem:[%s226 + $0x18] sm:$0xff] %v1809
      %1934 = vst [vmem:[%s226 + $0x20] sm:$0xff] %v1811
      %1935 = vst [vmem:[%s226 + $0x28] sm:$0xff] %v1813
      %1936 = vst [vmem:[%s226 + $0x30] sm:$0xff] %v1815
      %1937 = vst [vmem:[%s226 + $0x38] sm:$0xff] %v1817
      %1938 = vst [vmem:[%s226 + $0x40] sm:$0xff] %v1819
      %1939 = vst [vmem:[%s226 + $0x48] sm:$0xff] %v1821
      %1940 = vst [vmem:[%s226 + $0x50] sm:$0xff] %v1823
      %1941 = vst [vmem:[%s226 + $0x58] sm:$0xff] %v1825
      %1942 = vst [vmem:[%s226 + $0x60] sm:$0xff] %v1827
      %1943 = vst [vmem:[%s226 + $0x68] sm:$0xff] %v1829
      %1944 = vst [vmem:[%s226 + $0x70] sm:$0xff] %v1831
      %1945 = vst [vmem:[%s226 + $0x78] sm:$0xff] %v1833
      %1946 = vst [vmem:[%s226 + $0x80] sm:$0xff] %v1835
      %1947 = vst [vmem:[%s226 + $0x88] sm:$0xff] %v1837
      %1948 = vst [vmem:[%s226 + $0x90] sm:$0xff] %v1839
      %1949 = vst [vmem:[%s226 + $0x98] sm:$0xff] %v1841
      %1950 = vst [vmem:[%s226 + $0xa0] sm:$0xff] %v1843
      %1951 = vst [vmem:[%s226 + $0xa8] sm:$0xff] %v1845
      %1952 = vst [vmem:[%s226 + $0xb0] sm:$0xff] %v1847
      %1953 = vst [vmem:[%s226 + $0xb8] sm:$0xff] %v1849
      %1954 = vst [vmem:[%s226 + $0xc0] sm:$0xff] %v1851
      %1955 = vst [vmem:[%s226 + $0xc8] sm:$0xff] %v1853
      %1956 = vst [vmem:[%s226 + $0xd0] sm:$0xff] %v1855
      %1957 = vst [vmem:[%s226 + $0xd8] sm:$0xff] %v1857
      %1958 = vst [vmem:[%s226 + $0xe0] sm:$0xff] %v1859
      %1959 = vst [vmem:[%s226 + $0xe8] sm:$0xff] %v1861
      %1960 = vst [vmem:[%s226 + $0xf0] sm:$0xff] %v1863
      %1961 = vst [vmem:[%s226 + $0xf8] sm:$0xff] %v1865
      %1962 = vst [vmem:[%s226 + $0x100] sm:$0xff] %v1867
      %1963 = vst [vmem:[%s226 + $0x108] sm:$0xff] %v1869
      %1964 = vst [vmem:[%s226 + $0x110] sm:$0xff] %v1871
      %1965 = vst [vmem:[%s226 + $0x118] sm:$0xff] %v1873
      %1966 = vst [vmem:[%s226 + $0x120] sm:$0xff] %v1875
      %1967 = vst [vmem:[%s226 + $0x128] sm:$0xff] %v1877
      %1968 = vst [vmem:[%s226 + $0x130] sm:$0xff] %v1879
      %1969 = vst [vmem:[%s226 + $0x138] sm:$0xff] %v1881
      %1970 = vst [vmem:[%s226 + $0x140] sm:$0xff] %v1883
      %1971 = vst [vmem:[%s226 + $0x148] sm:$0xff] %v1885
      %1972 = vst [vmem:[%s226 + $0x150] sm:$0xff] %v1887
      %1973 = vst [vmem:[%s226 + $0x158] sm:$0xff] %v1889
      %1974 = vst [vmem:[%s226 + $0x160] sm:$0xff] %v1891
      %1975 = vst [vmem:[%s226 + $0x168] sm:$0xff] %v1893
      %1976 = vst [vmem:[%s226 + $0x170] sm:$0xff] %v1895
      %1977 = vst [vmem:[%s226 + $0x178] sm:$0xff] %v1897
      %1978 = vst [vmem:[%s226 + $0x180] sm:$0xff] %v1899
      %1979 = vst [vmem:[%s226 + $0x188] sm:$0xff] %v1901
      %1980 = vst [vmem:[%s226 + $0x190] sm:$0xff] %v1903
      %1981 = vst [vmem:[%s226 + $0x198] sm:$0xff] %v1905
      %1982 = vst [vmem:[%s226 + $0x1a0] sm:$0xff] %v1907
      %1983 = vst [vmem:[%s226 + $0x1a8] sm:$0xff] %v1909
      %1984 = vst [vmem:[%s226 + $0x1b0] sm:$0xff] %v1911
      %1985 = vst [vmem:[%s226 + $0x1b8] sm:$0xff] %v1913
      %1986 = vst [vmem:[%s226 + $0x1c0] sm:$0xff] %v1915
      %1987 = vst [vmem:[%s226 + $0x1c8] sm:$0xff] %v1917
      %1988 = vst [vmem:[%s226 + $0x1d0] sm:$0xff] %v1919
      %1989 = vst [vmem:[%s226 + $0x1d8] sm:$0xff] %v1921
      %1990 = vst [vmem:[%s226 + $0x1e0] sm:$0xff] %v1923
      %1991 = vst [vmem:[%s226 + $0x1e8] sm:$0xff] %v1925
      %1992 = vst [vmem:[%s226 + $0x1f0] sm:$0xff] %v1927
      %1993 = vst [vmem:[%s226 + $0x1f8] sm:$0xff] %v1929
      %s1994 = smul.u32 64, %s16
      %p1995 = scmp.lt.s32.totalorder %s1994, 127
      %s1996 = scalar_select %p1995, %s1994, 127
      %s1997 = smul.addr %s1996, 8
      %s1998 = scalar_lea.vmem %s5, %s1997
      // Predicated region
      $region41: #{actor_forward.1} parent=39 // pred_check
        %p1999 = pneg %p144
      $region42: #{actor_forward.1} parent=39 // pred_check_branch
        %2001 = sbr.rel (%p1999) target = $region44
      $region43: #{actor_forward.1} parent=39 // pred_region
        %s2002 = smul.u32 64, %s16
      $region44: #{actor_forward.1} parent=39 // pred_fallthru
        _
    $region40: #{actor_forward.1} parent=5 // pred_fallthru
      _
    %p2003 = scmp.le.s32.totalorder 2, %s11
    // Predicated region
    $region45: #{actor_forward.1} parent=5 // pred_check
      %p2004 = pneg %p2003
    $region46: #{actor_forward.1} parent=5 // pred_check_branch
      %2006 = sbr.rel (%p2004) target = $region48
    $region47: #{actor_forward.1} parent=5 // pred_region
      %s2007 = ssub.s32 %s11, 2
      // Predicated region
      $region49: #{actor_forward.1} parent=47 // pred_check
        %p2008 = pneg %p150
      $region50: #{actor_forward.1} parent=47 // pred_check_branch
        %2010 = sbr.rel (%p2008) target = $region52
      $region51: #{actor_forward.1} parent=47 // pred_region
        %s2011 = smul.u32 64, %s17
        %p2012 = scmp.lt.s32.totalorder %s2011, 127
        %s2013 = scalar_select %p2012, %s2011, 127
        %s2014 = smul.addr %s2013, 8
        %s2015 = scalar_lea.vmem %s5, %s2014
      $region52: #{actor_forward.1} parent=47 // pred_fallthru
        _
    $region48: #{actor_forward.1} parent=5 // pred_fallthru
      _
  $region6: #{actor_forward.1} parent=0 // loop_footer
    %s15 = sadd.s32 1, %s11
  $region7: #{actor_forward.1} parent=0 // loop_footer_branch
    %10 = sbr.rel target = $region3
  $region8: #{actor_forward.1} parent=0 // loop_exit
    _

</llo_original>
